<compile_context>
chip_gen: v7x
topology: tpu7x:2x2x1
jax: 0.10.0
libtpu: 0.0.40
codegen_flags: <defaults>
</compile_context>

<pallas_src>
import jax
import jax.numpy as jnp
from jax.experimental import pallas as pl
from jax.experimental.pallas import tpu as pltpu


def _full_spec(arr):
    nd = arr.ndim
    return pl.BlockSpec(arr.shape, lambda b, _nd=nd: (0,) * _nd)


def ashrae_lstm_pallas(cat_data, numeric_data, h0, c0, params, *, batch_block=8):
    """cat_data: (B, S, n_cat) int32; numeric_data: (B, S, n_num) f32;
       h0, c0: (1, B, H) f32.  Returns (out (B,S,1), h_n (1,B,H), c_n (1,B,H))."""
    assert batch_block % 8 == 0, "batch_block must be a multiple of 8 sublanes"

    # --- glue: embedding gathers + concat (pure indexing, no hot compute) ---
    embs = [jnp.take(W, cat_data[:, :, i], axis=0)
            for i, W in enumerate(params["emb"])]
    x = jnp.concatenate(embs + [numeric_data], axis=2).astype(jnp.float32)  # (B,S,F)
    B, S, F = x.shape
    H = h0.shape[-1]

    BB = batch_block
    Bp = ((B + BB - 1) // BB) * BB          # batch padded to sublane multiple
    NB = Bp // BB                           # number of batch blocks (grid size)
    pad = Bp - B

    # --- glue: pad batch, lay out time-major within each batch block ---
    xp = jnp.pad(x, ((0, pad), (0, 0), (0, 0)))            # (Bp, S, F)
    h0p = jnp.pad(h0[0], ((0, pad), (0, 0)))               # (Bp, H)
    c0p = jnp.pad(c0[0], ((0, pad), (0, 0)))               # (Bp, H)
    # row inside a block = t * BB + j   (j = in-block batch index)
    x_blk = xp.reshape(NB, BB, S, F).transpose(0, 2, 1, 3).reshape(NB, S * BB, F)
    h0_blk = h0p.reshape(NB, BB, H)
    c0_blk = c0p.reshape(NB, BB, H)

    # --- glue: pre-transpose weights, fold the two LSTM biases into one ---
    wihT = params["w_ih"].T                                # (F, 4H)
    whhT = params["w_hh"].T                                # (H, 4H)
    bias = (params["b_ih"] + params["b_hh"])[None, :]      # (1, 4H)
    w1T = params["w1"].T                                   # (H, 64)
    b1 = params["b1"][None, :]                             # (1, 64)
    w2T = params["w2"].T                                   # (64, 32)
    b2 = params["b2"][None, :]                             # (1, 32)
    w3 = params["w3"]                                      # (1, 32) row (VPU+reduce)
    b3 = params["b3"][None, :]                             # (1, 1)

    def kernel(x_ref, h0_ref, c0_ref, wihT_ref, whhT_ref, bias_ref,
               w1_ref, b1_ref, w2_ref, b2_ref, w3_ref, b3_ref,
               out_ref, hn_ref, cn_ref,
               pg_sc, hh_sc):
        # 1) Hoisted input projection: one big MXU matmul for all S steps.
        pg_sc[...] = (jnp.dot(x_ref[0], wihT_ref[...],
                              preferred_element_type=jnp.float32)
                      + bias_ref[...])                     # (S*BB, 4H)

        whhT_v = whhT_ref[...]                             # (H, 4H)
        h = h0_ref[0]                                      # (BB, H)
        c = c0_ref[0]                                      # (BB, H)

        # 2) Serial recurrence: only h @ W_hh^T + elementwise per step.
        #    Fully unrolled (S static & small); all slices are static/aligned.
        for t in range(S):
            r0 = t * BB
            gates = pg_sc[r0:r0 + BB, :] + jnp.dot(
                h, whhT_v, preferred_element_type=jnp.float32)   # (BB, 4H)
            # whole-vreg transcendentals (EUP), then static lane slices
            sig = jax.nn.sigmoid(gates)
            th = jnp.tanh(gates)
            i_g = sig[:, 0 * H:1 * H]
            f_g = sig[:, 1 * H:2 * H]
            g_g = th[:, 2 * H:3 * H]
            o_g = sig[:, 3 * H:4 * H]
            c = f_g * c + i_g * g_g
            h = o_g * jnp.tanh(c)
            hh_sc[r0:r0 + BB, :] = h

        hn_ref[0] = h
        cn_ref[0] = c

        # 3) Batched MLP head over all S*BB rows (dropout = identity at eval).
        # TODO(synk): training-mode dropout (stochastic masking) not implemented.
        hh = hh_sc[...]                                    # (S*BB, H)
        y = jnp.maximum(
            jnp.dot(hh, w1_ref[...], preferred_element_type=jnp.float32)
            + b1_ref[...], 0.0)                            # (S*BB, 64)
        y = jnp.maximum(
            jnp.dot(y, w2_ref[...], preferred_element_type=jnp.float32)
            + b2_ref[...], 0.0)                            # (S*BB, 32)
        # fc3 (32 -> 1) as VPU multiply + lane reduction (no N=1 MXU matmul).
        y = jnp.sum(y * w3_ref[...], axis=-1, keepdims=True) + b3_ref[...]
        out_ref[0] = y                                     # (S*BB, 1)

    grid_spec = pltpu.PrefetchScalarGridSpec(
        num_scalar_prefetch=0,
        grid=(NB,),
        in_specs=[
            pl.BlockSpec((1, S * BB, F), lambda b: (b, 0, 0)),   # x (per batch blk)
            pl.BlockSpec((1, BB, H), lambda b: (b, 0, 0)),       # h0
            pl.BlockSpec((1, BB, H), lambda b: (b, 0, 0)),       # c0
            _full_spec(wihT), _full_spec(whhT), _full_spec(bias),
            _full_spec(w1T), _full_spec(b1),
            _full_spec(w2T), _full_spec(b2),
            _full_spec(w3), _full_spec(b3),
        ],
        out_specs=[
            pl.BlockSpec((1, S * BB, 1), lambda b: (b, 0, 0)),   # head output
            pl.BlockSpec((1, BB, H), lambda b: (b, 0, 0)),       # h_n
            pl.BlockSpec((1, BB, H), lambda b: (b, 0, 0)),       # c_n
        ],
        scratch_shapes=[
            pltpu.VMEM((S * BB, 4 * H), jnp.float32),            # pre-gates
            pltpu.VMEM((S * BB, H), jnp.float32),                # h history
        ],
    )

    out_blk, hn_blk, cn_blk = pl.pallas_call(
        kernel,
        out_shape=(
            jax.ShapeDtypeStruct((NB, S * BB, 1), jnp.float32),
            jax.ShapeDtypeStruct((NB, BB, H), jnp.float32),
            jax.ShapeDtypeStruct((NB, BB, H), jnp.float32),
        ),
        grid_spec=grid_spec,
        compiler_params=pltpu.CompilerParams(
            dimension_semantics=("parallel",)),   # batch blocks are independent
    )(x_blk, h0_blk, c0_blk, wihT, whhT, bias, w1T, b1, w2T, b2, w3, b3)

    # --- glue: un-block / un-pad back to PyTorch layout ---
    out = (out_blk.reshape(NB, S, BB, 1)
                  .transpose(0, 2, 1, 3)
                  .reshape(Bp, S, 1)[:B])                        # (B, S, 1)
    h_n = hn_blk.reshape(Bp, H)[:B][None]                        # (1, B, H)
    c_n = cn_blk.reshape(Bp, H)[:B][None]                        # (1, B, H)
    return out, h_n, c_n


# ----------------------------------------------------------------------------
# Pure-JAX reference (mirrors PyTorch forward in eval mode) for verification.
# ----------------------------------------------------------------------------
def ashrae_lstm_ref(cat_data, numeric_data, h0, c0, params):
    embs = [jnp.take(W, cat_data[:, :, i], axis=0)
            for i, W in enumerate(params["emb"])]
    x = jnp.concatenate(embs + [numeric_data], axis=2)       # (B, S, F)
    x_tm = jnp.transpose(x, (1, 0, 2))                       # (S, B, F)
    H = h0.shape[-1]

    def step(carry, xt):
        h, c = carry
        gates = (xt @ params["w_ih"].T + h @ params["w_hh"].T
                 + params["b_ih"] + params["b_hh"])
        i_g = jax.nn.sigmoid(gates[:, :H])
        f_g = jax.nn.sigmoid(gates[:, H:2 * H])
        g_g = jnp.tanh(gates[:, 2 * H:3 * H])
        o_g = jax.nn.sigmoid(gates[:, 3 * H:])
        c = f_g * c + i_g * g_g
        h = o_g * jnp.tanh(c)
        return (h, c), h

    (hN, cN), hs = jax.lax.scan(step, (h0[0], c0[0]), x_tm)  # hs: (S, B, H)
    y = jnp.maximum(hs @ params["w1"].T + params["b1"], 0.0)
    y = jnp.maximum(y @ params["w2"].T + params["b2"], 0.0)
    y = y @ params["w3"].T + params["b3"]
    return jnp.transpose(y, (1, 0, 2)), hN[None], cN[None]


# ----------------------------------------------------------------------------
# Deterministic parameter construction (shapes implied by __init__).
# ----------------------------------------------------------------------------
def make_params(key, categorical_sizes, n_numeric, hidden_dim):
    emb_dims = [(c, min(50, (c + 1) // 2)) for c in categorical_sizes]
    total_size = sum(y for _, y in emb_dims) + n_numeric
    keys = jax.random.split(key, 16)
    kk = iter(keys)

    def u(k, shape, bound):
        return jax.random.uniform(k, shape, jnp.float32, -bound, bound)

    emb = []
    for (n_rows, e_dim) in emb_dims:
        W = jax.random.normal(next(kk), (n_rows, e_dim), jnp.float32)
        W = W.at[0].set(0.0)     # padding_idx=0
        emb.append(W)

    s = 1.0 / jnp.sqrt(hidden_dim)
    params = {
        "emb": emb,
        "w_ih": u(next(kk), (4 * hidden_dim, total_size), s),
        "w_hh": u(next(kk), (4 * hidden_dim, hidden_dim), s),
        "b_ih": u(next(kk), (4 * hidden_dim,), s),
        "b_hh": u(next(kk), (4 * hidden_dim,), s),
        "w1": u(next(kk), (64, hidden_dim), 1.0 / jnp.sqrt(hidden_dim)),
        "b1": u(next(kk), (64,), 1.0 / jnp.sqrt(hidden_dim)),
        "w2": u(next(kk), (32, 64), 1.0 / jnp.sqrt(64.0)),
        "b2": u(next(kk), (32,), 1.0 / jnp.sqrt(64.0)),
        "w3": u(next(kk), (1, 32), 1.0 / jnp.sqrt(32.0)),
        "b3": u(next(kk), (1,), 1.0 / jnp.sqrt(32.0)),
    }
    return params, total_size


if __name__ == "__main__":
    # Small shapes consistent with the module's forward signature.
    categorical_sizes = [10, 7, 5]     # -> emb dims 5, 4, 3  (total_embs = 12)
    n_numeric = 4                      # Numeric_Feat of length 4
    hidden_dim = 32                    # 4H = 128 -> one lane group
    B, S = 2, 8

    key = jax.random.PRNGKey(0)
    kp, kc, kn = jax.random.split(key, 3)
    params, total_size = make_params(kp, categorical_sizes, n_numeric, hidden_dim)

    cat_cols = []
    ck = jax.random.split(kc, len(categorical_sizes))
    for i, c in enumerate(categorical_sizes):
        cat_cols.append(jax.random.randint(ck[i], (B, S), 0, c, jnp.int32))
    cat_data = jnp.stack(cat_cols, axis=2)                    # (B, S, n_cat)
    numeric_data = jax.random.normal(kn, (B, S, n_numeric), jnp.float32)

    # init_hidden(batch_size): zeros of shape (1, B, H)
    h0 = jnp.zeros((1, B, hidden_dim), jnp.float32)
    c0 = jnp.zeros((1, B, hidden_dim), jnp.float32)

    out, h_n, c_n = ashrae_lstm_pallas(cat_data, numeric_data, h0, c0, params)
    out = jax.block_until_ready(out)
    h_n = jax.block_until_ready(h_n)
    c_n = jax.block_until_ready(c_n)

    out_r, h_r, c_r = ashrae_lstm_ref(cat_data, numeric_data, h0, c0, params)
    assert out.shape == (B, S, 1) and h_n.shape == (1, B, hidden_dim)
    assert jnp.allclose(out, out_r, atol=1e-4, rtol=1e-4)
    assert jnp.allclose(h_n, h_r, atol=1e-4, rtol=1e-4)
    assert jnp.allclose(c_n, c_r, atol=1e-4, rtol=1e-4)
    print("KERNEL_OK")
</pallas_src>

<mosaic_0001>
module attributes {stable_mosaic.version = 11 : i64} {
  func.func @kernel(%arg0: i32, %arg1: memref<1x64x16xf32, #tpu.memory_space<vmem>>, %arg2: memref<1x8x32xf32, #tpu.memory_space<vmem>>, %arg3: memref<1x8x32xf32, #tpu.memory_space<vmem>>, %arg4: memref<16x128xf32, #tpu.memory_space<vmem>>, %arg5: memref<32x128xf32, #tpu.memory_space<vmem>>, %arg6: memref<1x128xf32, #tpu.memory_space<vmem>>, %arg7: memref<32x64xf32, #tpu.memory_space<vmem>>, %arg8: memref<1x64xf32, #tpu.memory_space<vmem>>, %arg9: memref<64x32xf32, #tpu.memory_space<vmem>>, %arg10: memref<1x32xf32, #tpu.memory_space<vmem>>, %arg11: memref<1x32xf32, #tpu.memory_space<vmem>>, %arg12: memref<1x1xf32, #tpu.memory_space<vmem>>, %arg13: memref<1x64x1xf32, #tpu.memory_space<vmem>>, %arg14: memref<1x8x32xf32, #tpu.memory_space<vmem>>, %arg15: memref<1x8x32xf32, #tpu.memory_space<vmem>>, %arg16: memref<64x128xf32, #tpu.memory_space<vmem>>, %arg17: memref<64x32xf32, #tpu.memory_space<vmem>>) attributes {dimension_semantics = [#tpu.dimension_semantics<parallel>], iteration_bounds = array<i64: 1>, scalar_prefetch = 0 : i64, scratch_operands = 2 : i64, tpu.core_type = #tpu.core_type<tc>, window_params = [{transform_indices = @transform_0, window_bounds = array<i64: 1, 64, 16>}, {transform_indices = @transform_1, window_bounds = array<i64: 1, 8, 32>}, {transform_indices = @transform_2, window_bounds = array<i64: 1, 8, 32>}, {pipeline_mode = #tpu.pipeline_mode<synchronous>, transform_indices = @transform_3, window_bounds = array<i64: 16, 128>}, {pipeline_mode = #tpu.pipeline_mode<synchronous>, transform_indices = @transform_4, window_bounds = array<i64: 32, 128>}, {pipeline_mode = #tpu.pipeline_mode<synchronous>, transform_indices = @transform_5, window_bounds = array<i64: 1, 128>}, {pipeline_mode = #tpu.pipeline_mode<synchronous>, transform_indices = @transform_6, window_bounds = array<i64: 32, 64>}, {pipeline_mode = #tpu.pipeline_mode<synchronous>, transform_indices = @transform_7, window_bounds = array<i64: 1, 64>}, {pipeline_mode = #tpu.pipeline_mode<synchronous>, transform_indices = @transform_8, window_bounds = array<i64: 64, 32>}, {pipeline_mode = #tpu.pipeline_mode<synchronous>, transform_indices = @transform_9, window_bounds = array<i64: 1, 32>}, {pipeline_mode = #tpu.pipeline_mode<synchronous>, transform_indices = @transform_10, window_bounds = array<i64: 1, 32>}, {pipeline_mode = #tpu.pipeline_mode<synchronous>, transform_indices = @transform_11, window_bounds = array<i64: 1, 1>}, {transform_indices = @transform_12, window_bounds = array<i64: 1, 64, 1>}, {transform_indices = @transform_13, window_bounds = array<i64: 1, 8, 32>}, {transform_indices = @transform_14, window_bounds = array<i64: 1, 8, 32>}]} {
    %c0 = arith.constant 0 : index
    %c0_0 = arith.constant 0 : index
    %c0_1 = arith.constant 0 : index
    %0 = vector.load %arg1[%c0, %c0_0, %c0_1] : memref<1x64x16xf32, #tpu.memory_space<vmem>>, vector<1x64x16xf32>
    %1 = vector.shape_cast %0 : vector<1x64x16xf32> to vector<64x16xf32>
    %c0_2 = arith.constant 0 : index
    %c0_3 = arith.constant 0 : index
    %2 = vector.load %arg4[%c0_2, %c0_3] : memref<16x128xf32, #tpu.memory_space<vmem>>, vector<16x128xf32>
    %cst = arith.constant dense<0.000000e+00> : vector<64x128xf32>
    %3 = tpu.matmul %1, %2, %cst {dimension_numbers = #tpu.dot_dimension_numbers<[1], [0], [0], [1], [0, 0, 1, 1], [], []>} : vector<64x16xf32>, vector<16x128xf32>, vector<64x128xf32> -> vector<64x128xf32>
    %c0_4 = arith.constant 0 : index
    %c0_5 = arith.constant 0 : index
    %4 = vector.load %arg6[%c0_4, %c0_5] : memref<1x128xf32, #tpu.memory_space<vmem>>, vector<1x128xf32>
    %5 = vector.broadcast %4 : vector<1x128xf32> to vector<64x128xf32>
    %6 = arith.addf %3, %5 : vector<64x128xf32>
    %c0_6 = arith.constant 0 : index
    %c0_7 = arith.constant 0 : index
    %7 = vector.load %arg16[%c0_6, %c0_7] : memref<64x128xf32, #tpu.memory_space<vmem>>, vector<64x128xf32>
    tpu.vector_store %arg16[%c0_6, %c0_7], %6 {strides = array<i32>} : memref<64x128xf32, #tpu.memory_space<vmem>>, vector<64x128xf32>,
    %c0_8 = arith.constant 0 : index
    %c0_9 = arith.constant 0 : index
    %8 = vector.load %arg5[%c0_8, %c0_9] : memref<32x128xf32, #tpu.memory_space<vmem>>, vector<32x128xf32>
    %c0_10 = arith.constant 0 : index
    %c0_11 = arith.constant 0 : index
    %c0_12 = arith.constant 0 : index
    %9 = vector.load %arg2[%c0_10, %c0_11, %c0_12] : memref<1x8x32xf32, #tpu.memory_space<vmem>>, vector<1x8x32xf32>
    %10 = vector.shape_cast %9 : vector<1x8x32xf32> to vector<8x32xf32>
    %c0_13 = arith.constant 0 : index
    %c0_14 = arith.constant 0 : index
    %c0_15 = arith.constant 0 : index
    %11 = vector.load %arg3[%c0_13, %c0_14, %c0_15] : memref<1x8x32xf32, #tpu.memory_space<vmem>>, vector<1x8x32xf32>
    %12 = vector.shape_cast %11 : vector<1x8x32xf32> to vector<8x32xf32>
    %c0_16 = arith.constant 0 : index
    %c0_17 = arith.constant 0 : index
    %13 = vector.load %arg16[%c0_16, %c0_17] : memref<64x128xf32, #tpu.memory_space<vmem>>, vector<8x128xf32>
    %cst_18 = arith.constant dense<0.000000e+00> : vector<8x128xf32>
    %14 = tpu.matmul %10, %8, %cst_18 {dimension_numbers = #tpu.dot_dimension_numbers<[1], [0], [0], [1], [0, 0, 1, 1], [], []>} : vector<8x32xf32>, vector<32x128xf32>, vector<8x128xf32> -> vector<8x128xf32>
    %15 = arith.addf %13, %14 : vector<8x128xf32>
    %16 = arith.negf %15 : vector<8x128xf32>
    %17 = math.exp %16 : vector<8x128xf32>
    %cst_19 = arith.constant 1.000000e+00 : f32
    %18 = vector.broadcast %cst_19 : f32 to vector<8x128xf32>
    %19 = arith.addf %18, %17 : vector<8x128xf32>
    %20 = arith.divf %18, %19 : vector<8x128xf32>
    %21 = math.tanh %15 : vector<8x128xf32>
    %22 = vector.extract_strided_slice %20 {offsets = [0, 0], sizes = [8, 32], strides = [1, 1]} : vector<8x128xf32> to vector<8x32xf32>
    %23 = vector.extract_strided_slice %20 {offsets = [0, 32], sizes = [8, 32], strides = [1, 1]} : vector<8x128xf32> to vector<8x32xf32>
    %24 = vector.extract_strided_slice %21 {offsets = [0, 64], sizes = [8, 32], strides = [1, 1]} : vector<8x128xf32> to vector<8x32xf32>
    %25 = vector.extract_strided_slice %20 {offsets = [0, 96], sizes = [8, 32], strides = [1, 1]} : vector<8x128xf32> to vector<8x32xf32>
    %26 = arith.mulf %23, %12 : vector<8x32xf32>
    %27 = arith.mulf %22, %24 : vector<8x32xf32>
    %28 = arith.addf %26, %27 : vector<8x32xf32>
    %29 = math.tanh %28 : vector<8x32xf32>
    %30 = arith.mulf %25, %29 : vector<8x32xf32>
    %c0_20 = arith.constant 0 : index
    %c0_21 = arith.constant 0 : index
    %31 = vector.load %arg17[%c0_20, %c0_21] : memref<64x32xf32, #tpu.memory_space<vmem>>, vector<8x32xf32>
    tpu.vector_store %arg17[%c0_20, %c0_21], %30 {strides = array<i32>} : memref<64x32xf32, #tpu.memory_space<vmem>>, vector<8x32xf32>,
    %c8 = arith.constant 8 : index
    %c0_22 = arith.constant 0 : index
    %32 = vector.load %arg16[%c8, %c0_22] : memref<64x128xf32, #tpu.memory_space<vmem>>, vector<8x128xf32>
    %cst_23 = arith.constant dense<0.000000e+00> : vector<8x128xf32>
    %33 = tpu.matmul %30, %8, %cst_23 {dimension_numbers = #tpu.dot_dimension_numbers<[1], [0], [0], [1], [0, 0, 1, 1], [], []>} : vector<8x32xf32>, vector<32x128xf32>, vector<8x128xf32> -> vector<8x128xf32>
    %34 = arith.addf %32, %33 : vector<8x128xf32>
    %35 = arith.negf %34 : vector<8x128xf32>
    %36 = math.exp %35 : vector<8x128xf32>
    %cst_24 = arith.constant 1.000000e+00 : f32
    %37 = vector.broadcast %cst_24 : f32 to vector<8x128xf32>
    %38 = arith.addf %37, %36 : vector<8x128xf32>
    %39 = arith.divf %37, %38 : vector<8x128xf32>
    %40 = math.tanh %34 : vector<8x128xf32>
    %41 = vector.extract_strided_slice %39 {offsets = [0, 0], sizes = [8, 32], strides = [1, 1]} : vector<8x128xf32> to vector<8x32xf32>
    %42 = vector.extract_strided_slice %39 {offsets = [0, 32], sizes = [8, 32], strides = [1, 1]} : vector<8x128xf32> to vector<8x32xf32>
    %43 = vector.extract_strided_slice %40 {offsets = [0, 64], sizes = [8, 32], strides = [1, 1]} : vector<8x128xf32> to vector<8x32xf32>
    %44 = vector.extract_strided_slice %39 {offsets = [0, 96], sizes = [8, 32], strides = [1, 1]} : vector<8x128xf32> to vector<8x32xf32>
    %45 = arith.mulf %42, %28 : vector<8x32xf32>
    %46 = arith.mulf %41, %43 : vector<8x32xf32>
    %47 = arith.addf %45, %46 : vector<8x32xf32>
    %48 = math.tanh %47 : vector<8x32xf32>
    %49 = arith.mulf %44, %48 : vector<8x32xf32>
    %c8_25 = arith.constant 8 : index
    %c0_26 = arith.constant 0 : index
    %50 = vector.load %arg17[%c8_25, %c0_26] : memref<64x32xf32, #tpu.memory_space<vmem>>, vector<8x32xf32>
    tpu.vector_store %arg17[%c8_25, %c0_26], %49 {strides = array<i32>} : memref<64x32xf32, #tpu.memory_space<vmem>>, vector<8x32xf32>,
    %c16 = arith.constant 16 : index
    %c0_27 = arith.constant 0 : index
    %51 = vector.load %arg16[%c16, %c0_27] : memref<64x128xf32, #tpu.memory_space<vmem>>, vector<8x128xf32>
    %cst_28 = arith.constant dense<0.000000e+00> : vector<8x128xf32>
    %52 = tpu.matmul %49, %8, %cst_28 {dimension_numbers = #tpu.dot_dimension_numbers<[1], [0], [0], [1], [0, 0, 1, 1], [], []>} : vector<8x32xf32>, vector<32x128xf32>, vector<8x128xf32> -> vector<8x128xf32>
    %53 = arith.addf %51, %52 : vector<8x128xf32>
    %54 = arith.negf %53 : vector<8x128xf32>
    %55 = math.exp %54 : vector<8x128xf32>
    %cst_29 = arith.constant 1.000000e+00 : f32
    %56 = vector.broadcast %cst_29 : f32 to vector<8x128xf32>
    %57 = arith.addf %56, %55 : vector<8x128xf32>
    %58 = arith.divf %56, %57 : vector<8x128xf32>
    %59 = math.tanh %53 : vector<8x128xf32>
    %60 = vector.extract_strided_slice %58 {offsets = [0, 0], sizes = [8, 32], strides = [1, 1]} : vector<8x128xf32> to vector<8x32xf32>
    %61 = vector.extract_strided_slice %58 {offsets = [0, 32], sizes = [8, 32], strides = [1, 1]} : vector<8x128xf32> to vector<8x32xf32>
    %62 = vector.extract_strided_slice %59 {offsets = [0, 64], sizes = [8, 32], strides = [1, 1]} : vector<8x128xf32> to vector<8x32xf32>
    %63 = vector.extract_strided_slice %58 {offsets = [0, 96], sizes = [8, 32], strides = [1, 1]} : vector<8x128xf32> to vector<8x32xf32>
    %64 = arith.mulf %61, %47 : vector<8x32xf32>
    %65 = arith.mulf %60, %62 : vector<8x32xf32>
    %66 = arith.addf %64, %65 : vector<8x32xf32>
    %67 = math.tanh %66 : vector<8x32xf32>
    %68 = arith.mulf %63, %67 : vector<8x32xf32>
    %c16_30 = arith.constant 16 : index
    %c0_31 = arith.constant 0 : index
    %69 = vector.load %arg17[%c16_30, %c0_31] : memref<64x32xf32, #tpu.memory_space<vmem>>, vector<8x32xf32>
    tpu.vector_store %arg17[%c16_30, %c0_31], %68 {strides = array<i32>} : memref<64x32xf32, #tpu.memory_space<vmem>>, vector<8x32xf32>,
    %c24 = arith.constant 24 : index
    %c0_32 = arith.constant 0 : index
    %70 = vector.load %arg16[%c24, %c0_32] : memref<64x128xf32, #tpu.memory_space<vmem>>, vector<8x128xf32>
    %cst_33 = arith.constant dense<0.000000e+00> : vector<8x128xf32>
    %71 = tpu.matmul %68, %8, %cst_33 {dimension_numbers = #tpu.dot_dimension_numbers<[1], [0], [0], [1], [0, 0, 1, 1], [], []>} : vector<8x32xf32>, vector<32x128xf32>, vector<8x128xf32> -> vector<8x128xf32>
    %72 = arith.addf %70, %71 : vector<8x128xf32>
    %73 = arith.negf %72 : vector<8x128xf32>
    %74 = math.exp %73 : vector<8x128xf32>
    %cst_34 = arith.constant 1.000000e+00 : f32
    %75 = vector.broadcast %cst_34 : f32 to vector<8x128xf32>
    %76 = arith.addf %75, %74 : vector<8x128xf32>
    %77 = arith.divf %75, %76 : vector<8x128xf32>
    %78 = math.tanh %72 : vector<8x128xf32>
    %79 = vector.extract_strided_slice %77 {offsets = [0, 0], sizes = [8, 32], strides = [1, 1]} : vector<8x128xf32> to vector<8x32xf32>
    %80 = vector.extract_strided_slice %77 {offsets = [0, 32], sizes = [8, 32], strides = [1, 1]} : vector<8x128xf32> to vector<8x32xf32>
    %81 = vector.extract_strided_slice %78 {offsets = [0, 64], sizes = [8, 32], strides = [1, 1]} : vector<8x128xf32> to vector<8x32xf32>
    %82 = vector.extract_strided_slice %77 {offsets = [0, 96], sizes = [8, 32], strides = [1, 1]} : vector<8x128xf32> to vector<8x32xf32>
    %83 = arith.mulf %80, %66 : vector<8x32xf32>
    %84 = arith.mulf %79, %81 : vector<8x32xf32>
    %85 = arith.addf %83, %84 : vector<8x32xf32>
    %86 = math.tanh %85 : vector<8x32xf32>
    %87 = arith.mulf %82, %86 : vector<8x32xf32>
    %c24_35 = arith.constant 24 : index
    %c0_36 = arith.constant 0 : index
    %88 = vector.load %arg17[%c24_35, %c0_36] : memref<64x32xf32, #tpu.memory_space<vmem>>, vector<8x32xf32>
    tpu.vector_store %arg17[%c24_35, %c0_36], %87 {strides = array<i32>} : memref<64x32xf32, #tpu.memory_space<vmem>>, vector<8x32xf32>,
    %c32 = arith.constant 32 : index
    %c0_37 = arith.constant 0 : index
    %89 = vector.load %arg16[%c32, %c0_37] : memref<64x128xf32, #tpu.memory_space<vmem>>, vector<8x128xf32>
    %cst_38 = arith.constant dense<0.000000e+00> : vector<8x128xf32>
    %90 = tpu.matmul %87, %8, %cst_38 {dimension_numbers = #tpu.dot_dimension_numbers<[1], [0], [0], [1], [0, 0, 1, 1], [], []>} : vector<8x32xf32>, vector<32x128xf32>, vector<8x128xf32> -> vector<8x128xf32>
    %91 = arith.addf %89, %90 : vector<8x128xf32>
    %92 = arith.negf %91 : vector<8x128xf32>
    %93 = math.exp %92 : vector<8x128xf32>
    %cst_39 = arith.constant 1.000000e+00 : f32
    %94 = vector.broadcast %cst_39 : f32 to vector<8x128xf32>
    %95 = arith.addf %94, %93 : vector<8x128xf32>
    %96 = arith.divf %94, %95 : vector<8x128xf32>
    %97 = math.tanh %91 : vector<8x128xf32>
    %98 = vector.extract_strided_slice %96 {offsets = [0, 0], sizes = [8, 32], strides = [1, 1]} : vector<8x128xf32> to vector<8x32xf32>
    %99 = vector.extract_strided_slice %96 {offsets = [0, 32], sizes = [8, 32], strides = [1, 1]} : vector<8x128xf32> to vector<8x32xf32>
    %100 = vector.extract_strided_slice %97 {offsets = [0, 64], sizes = [8, 32], strides = [1, 1]} : vector<8x128xf32> to vector<8x32xf32>
    %101 = vector.extract_strided_slice %96 {offsets = [0, 96], sizes = [8, 32], strides = [1, 1]} : vector<8x128xf32> to vector<8x32xf32>
    %102 = arith.mulf %99, %85 : vector<8x32xf32>
    %103 = arith.mulf %98, %100 : vector<8x32xf32>
    %104 = arith.addf %102, %103 : vector<8x32xf32>
    %105 = math.tanh %104 : vector<8x32xf32>
    %106 = arith.mulf %101, %105 : vector<8x32xf32>
    %c32_40 = arith.constant 32 : index
    %c0_41 = arith.constant 0 : index
    %107 = vector.load %arg17[%c32_40, %c0_41] : memref<64x32xf32, #tpu.memory_space<vmem>>, vector<8x32xf32>
    tpu.vector_store %arg17[%c32_40, %c0_41], %106 {strides = array<i32>} : memref<64x32xf32, #tpu.memory_space<vmem>>, vector<8x32xf32>,
    %c40 = arith.constant 40 : index
    %c0_42 = arith.constant 0 : index
    %108 = vector.load %arg16[%c40, %c0_42] : memref<64x128xf32, #tpu.memory_space<vmem>>, vector<8x128xf32>
    %cst_43 = arith.constant dense<0.000000e+00> : vector<8x128xf32>
    %109 = tpu.matmul %106, %8, %cst_43 {dimension_numbers = #tpu.dot_dimension_numbers<[1], [0], [0], [1], [0, 0, 1, 1], [], []>} : vector<8x32xf32>, vector<32x128xf32>, vector<8x128xf32> -> vector<8x128xf32>
    %110 = arith.addf %108, %109 : vector<8x128xf32>
    %111 = arith.negf %110 : vector<8x128xf32>
    %112 = math.exp %111 : vector<8x128xf32>
    %cst_44 = arith.constant 1.000000e+00 : f32
    %113 = vector.broadcast %cst_44 : f32 to vector<8x128xf32>
    %114 = arith.addf %113, %112 : vector<8x128xf32>
    %115 = arith.divf %113, %114 : vector<8x128xf32>
    %116 = math.tanh %110 : vector<8x128xf32>
    %117 = vector.extract_strided_slice %115 {offsets = [0, 0], sizes = [8, 32], strides = [1, 1]} : vector<8x128xf32> to vector<8x32xf32>
    %118 = vector.extract_strided_slice %115 {offsets = [0, 32], sizes = [8, 32], strides = [1, 1]} : vector<8x128xf32> to vector<8x32xf32>
    %119 = vector.extract_strided_slice %116 {offsets = [0, 64], sizes = [8, 32], strides = [1, 1]} : vector<8x128xf32> to vector<8x32xf32>
    %120 = vector.extract_strided_slice %115 {offsets = [0, 96], sizes = [8, 32], strides = [1, 1]} : vector<8x128xf32> to vector<8x32xf32>
    %121 = arith.mulf %118, %104 : vector<8x32xf32>
    %122 = arith.mulf %117, %119 : vector<8x32xf32>
    %123 = arith.addf %121, %122 : vector<8x32xf32>
    %124 = math.tanh %123 : vector<8x32xf32>
    %125 = arith.mulf %120, %124 : vector<8x32xf32>
    %c40_45 = arith.constant 40 : index
    %c0_46 = arith.constant 0 : index
    %126 = vector.load %arg17[%c40_45, %c0_46] : memref<64x32xf32, #tpu.memory_space<vmem>>, vector<8x32xf32>
    tpu.vector_store %arg17[%c40_45, %c0_46], %125 {strides = array<i32>} : memref<64x32xf32, #tpu.memory_space<vmem>>, vector<8x32xf32>,
    %c48 = arith.constant 48 : index
    %c0_47 = arith.constant 0 : index
    %127 = vector.load %arg16[%c48, %c0_47] : memref<64x128xf32, #tpu.memory_space<vmem>>, vector<8x128xf32>
    %cst_48 = arith.constant dense<0.000000e+00> : vector<8x128xf32>
    %128 = tpu.matmul %125, %8, %cst_48 {dimension_numbers = #tpu.dot_dimension_numbers<[1], [0], [0], [1], [0, 0, 1, 1], [], []>} : vector<8x32xf32>, vector<32x128xf32>, vector<8x128xf32> -> vector<8x128xf32>
    %129 = arith.addf %127, %128 : vector<8x128xf32>
    %130 = arith.negf %129 : vector<8x128xf32>
    %131 = math.exp %130 : vector<8x128xf32>
    %cst_49 = arith.constant 1.000000e+00 : f32
    %132 = vector.broadcast %cst_49 : f32 to vector<8x128xf32>
    %133 = arith.addf %132, %131 : vector<8x128xf32>
    %134 = arith.divf %132, %133 : vector<8x128xf32>
    %135 = math.tanh %129 : vector<8x128xf32>
    %136 = vector.extract_strided_slice %134 {offsets = [0, 0], sizes = [8, 32], strides = [1, 1]} : vector<8x128xf32> to vector<8x32xf32>
    %137 = vector.extract_strided_slice %134 {offsets = [0, 32], sizes = [8, 32], strides = [1, 1]} : vector<8x128xf32> to vector<8x32xf32>
    %138 = vector.extract_strided_slice %135 {offsets = [0, 64], sizes = [8, 32], strides = [1, 1]} : vector<8x128xf32> to vector<8x32xf32>
    %139 = vector.extract_strided_slice %134 {offsets = [0, 96], sizes = [8, 32], strides = [1, 1]} : vector<8x128xf32> to vector<8x32xf32>
    %140 = arith.mulf %137, %123 : vector<8x32xf32>
    %141 = arith.mulf %136, %138 : vector<8x32xf32>
    %142 = arith.addf %140, %141 : vector<8x32xf32>
    %143 = math.tanh %142 : vector<8x32xf32>
    %144 = arith.mulf %139, %143 : vector<8x32xf32>
    %c48_50 = arith.constant 48 : index
    %c0_51 = arith.constant 0 : index
    %145 = vector.load %arg17[%c48_50, %c0_51] : memref<64x32xf32, #tpu.memory_space<vmem>>, vector<8x32xf32>
    tpu.vector_store %arg17[%c48_50, %c0_51], %144 {strides = array<i32>} : memref<64x32xf32, #tpu.memory_space<vmem>>, vector<8x32xf32>,
    %c56 = arith.constant 56 : index
    %c0_52 = arith.constant 0 : index
    %146 = vector.load %arg16[%c56, %c0_52] : memref<64x128xf32, #tpu.memory_space<vmem>>, vector<8x128xf32>
    %cst_53 = arith.constant dense<0.000000e+00> : vector<8x128xf32>
    %147 = tpu.matmul %144, %8, %cst_53 {dimension_numbers = #tpu.dot_dimension_numbers<[1], [0], [0], [1], [0, 0, 1, 1], [], []>} : vector<8x32xf32>, vector<32x128xf32>, vector<8x128xf32> -> vector<8x128xf32>
    %148 = arith.addf %146, %147 : vector<8x128xf32>
    %149 = arith.negf %148 : vector<8x128xf32>
    %150 = math.exp %149 : vector<8x128xf32>
    %cst_54 = arith.constant 1.000000e+00 : f32
    %151 = vector.broadcast %cst_54 : f32 to vector<8x128xf32>
    %152 = arith.addf %151, %150 : vector<8x128xf32>
    %153 = arith.divf %151, %152 : vector<8x128xf32>
    %154 = math.tanh %148 : vector<8x128xf32>
    %155 = vector.extract_strided_slice %153 {offsets = [0, 0], sizes = [8, 32], strides = [1, 1]} : vector<8x128xf32> to vector<8x32xf32>
    %156 = vector.extract_strided_slice %153 {offsets = [0, 32], sizes = [8, 32], strides = [1, 1]} : vector<8x128xf32> to vector<8x32xf32>
    %157 = vector.extract_strided_slice %154 {offsets = [0, 64], sizes = [8, 32], strides = [1, 1]} : vector<8x128xf32> to vector<8x32xf32>
    %158 = vector.extract_strided_slice %153 {offsets = [0, 96], sizes = [8, 32], strides = [1, 1]} : vector<8x128xf32> to vector<8x32xf32>
    %159 = arith.mulf %156, %142 : vector<8x32xf32>
    %160 = arith.mulf %155, %157 : vector<8x32xf32>
    %161 = arith.addf %159, %160 : vector<8x32xf32>
    %162 = math.tanh %161 : vector<8x32xf32>
    %163 = arith.mulf %158, %162 : vector<8x32xf32>
    %c56_55 = arith.constant 56 : index
    %c0_56 = arith.constant 0 : index
    %164 = vector.load %arg17[%c56_55, %c0_56] : memref<64x32xf32, #tpu.memory_space<vmem>>, vector<8x32xf32>
    tpu.vector_store %arg17[%c56_55, %c0_56], %163 {strides = array<i32>} : memref<64x32xf32, #tpu.memory_space<vmem>>, vector<8x32xf32>,
    %c0_57 = arith.constant 0 : index
    %c0_58 = arith.constant 0 : index
    %c0_59 = arith.constant 0 : index
    %165 = vector.load %arg14[%c0_57, %c0_58, %c0_59] : memref<1x8x32xf32, #tpu.memory_space<vmem>>, vector<1x8x32xf32>
    %166 = vector.shape_cast %165 : vector<1x8x32xf32> to vector<8x32xf32>
    %167 = vector.shape_cast %163 : vector<8x32xf32> to vector<1x8x32xf32>
    tpu.vector_store %arg14[%c0_57, %c0_58, %c0_59], %167 {strides = array<i32>} : memref<1x8x32xf32, #tpu.memory_space<vmem>>, vector<1x8x32xf32>,
    %c0_60 = arith.constant 0 : index
    %c0_61 = arith.constant 0 : index
    %c0_62 = arith.constant 0 : index
    %168 = vector.load %arg15[%c0_60, %c0_61, %c0_62] : memref<1x8x32xf32, #tpu.memory_space<vmem>>, vector<1x8x32xf32>
    %169 = vector.shape_cast %168 : vector<1x8x32xf32> to vector<8x32xf32>
    %170 = vector.shape_cast %161 : vector<8x32xf32> to vector<1x8x32xf32>
    tpu.vector_store %arg15[%c0_60, %c0_61, %c0_62], %170 {strides = array<i32>} : memref<1x8x32xf32, #tpu.memory_space<vmem>>, vector<1x8x32xf32>,
    %c0_63 = arith.constant 0 : index
    %c0_64 = arith.constant 0 : index
    %171 = vector.load %arg17[%c0_63, %c0_64] : memref<64x32xf32, #tpu.memory_space<vmem>>, vector<64x32xf32>
    %c0_65 = arith.constant 0 : index
    %c0_66 = arith.constant 0 : index
    %172 = vector.load %arg7[%c0_65, %c0_66] : memref<32x64xf32, #tpu.memory_space<vmem>>, vector<32x64xf32>
    %cst_67 = arith.constant dense<0.000000e+00> : vector<64x64xf32>
    %173 = tpu.matmul %171, %172, %cst_67 {dimension_numbers = #tpu.dot_dimension_numbers<[1], [0], [0], [1], [0, 0, 1, 1], [], []>} : vector<64x32xf32>, vector<32x64xf32>, vector<64x64xf32> -> vector<64x64xf32>
    %c0_68 = arith.constant 0 : index
    %c0_69 = arith.constant 0 : index
    %174 = vector.load %arg8[%c0_68, %c0_69] : memref<1x64xf32, #tpu.memory_space<vmem>>, vector<1x64xf32>
    %175 = vector.broadcast %174 : vector<1x64xf32> to vector<64x64xf32>
    %176 = arith.addf %173, %175 : vector<64x64xf32>
    %cst_70 = arith.constant 0.000000e+00 : f32
    %177 = vector.broadcast %cst_70 : f32 to vector<64x64xf32>
    %178 = arith.maximumf %176, %177 : vector<64x64xf32>
    %c0_71 = arith.constant 0 : index
    %c0_72 = arith.constant 0 : index
    %179 = vector.load %arg9[%c0_71, %c0_72] : memref<64x32xf32, #tpu.memory_space<vmem>>, vector<64x32xf32>
    %cst_73 = arith.constant dense<0.000000e+00> : vector<64x32xf32>
    %180 = tpu.matmul %178, %179, %cst_73 {dimension_numbers = #tpu.dot_dimension_numbers<[1], [0], [0], [1], [0, 0, 1, 1], [], []>} : vector<64x64xf32>, vector<64x32xf32>, vector<64x32xf32> -> vector<64x32xf32>
    %c0_74 = arith.constant 0 : index
    %c0_75 = arith.constant 0 : index
    %181 = vector.load %arg10[%c0_74, %c0_75] : memref<1x32xf32, #tpu.memory_space<vmem>>, vector<1x32xf32>
    %182 = vector.broadcast %181 : vector<1x32xf32> to vector<64x32xf32>
    %183 = arith.addf %180, %182 : vector<64x32xf32>
    %cst_76 = arith.constant 0.000000e+00 : f32
    %184 = vector.broadcast %cst_76 : f32 to vector<64x32xf32>
    %185 = arith.maximumf %183, %184 : vector<64x32xf32>
    %c0_77 = arith.constant 0 : index
    %c0_78 = arith.constant 0 : index
    %186 = vector.load %arg11[%c0_77, %c0_78] : memref<1x32xf32, #tpu.memory_space<vmem>>, vector<1x32xf32>
    %187 = vector.broadcast %186 : vector<1x32xf32> to vector<64x32xf32>
    %188 = arith.mulf %185, %187 : vector<64x32xf32>
    %cst_79 = arith.constant dense<0.000000e+00> : vector<64xf32>
    %189 = vector.multi_reduction <add>, %188, %cst_79 [1] : vector<64x32xf32> to vector<64xf32>
    %190 = vector.shape_cast %189 : vector<64xf32> to vector<64x1xf32>
    %c0_80 = arith.constant 0 : index
    %c0_81 = arith.constant 0 : index
    %191 = vector.load %arg12[%c0_80, %c0_81] : memref<1x1xf32, #tpu.memory_space<vmem>>, vector<1x1xf32>
    %192 = vector.broadcast %191 : vector<1x1xf32> to vector<64x1xf32>
    %193 = arith.addf %190, %192 : vector<64x1xf32>
    %c0_82 = arith.constant 0 : index
    %c0_83 = arith.constant 0 : index
    %c0_84 = arith.constant 0 : index
    %194 = vector.load %arg13[%c0_82, %c0_83, %c0_84] : memref<1x64x1xf32, #tpu.memory_space<vmem>>, vector<1x64x1xf32>
    %195 = vector.shape_cast %194 : vector<1x64x1xf32> to vector<64x1xf32>
    %196 = vector.shape_cast %193 : vector<64x1xf32> to vector<1x64x1xf32>
    tpu.vector_store %arg13[%c0_82, %c0_83, %c0_84], %196 {strides = array<i32>} : memref<1x64x1xf32, #tpu.memory_space<vmem>>, vector<1x64x1xf32>,
    return
  }
  func.func @transform_0(%arg0: i32) -> (i32, i32, i32) {
    %c0_i32 = arith.constant 0 : i32
    %c0_i32_0 = arith.constant 0 : i32
    %c0_i32_1 = arith.constant 0 : i32
    return %arg0, %c0_i32, %c0_i32_0 : i32, i32, i32
  }
  func.func @transform_1(%arg0: i32) -> (i32, i32, i32) {
    %c0_i32 = arith.constant 0 : i32
    %c0_i32_0 = arith.constant 0 : i32
    %c0_i32_1 = arith.constant 0 : i32
    return %arg0, %c0_i32, %c0_i32_0 : i32, i32, i32
  }
  func.func @transform_2(%arg0: i32) -> (i32, i32, i32) {
    %c0_i32 = arith.constant 0 : i32
    %c0_i32_0 = arith.constant 0 : i32
    %c0_i32_1 = arith.constant 0 : i32
    return %arg0, %c0_i32, %c0_i32_0 : i32, i32, i32
  }
  func.func @transform_3(%arg0: i32) -> (i32, i32) {
    %c0_i32 = arith.constant 0 : i32
    %c0_i32_0 = arith.constant 0 : i32
    %c0_i32_1 = arith.constant 0 : i32
    return %c0_i32, %c0_i32_0 : i32, i32
  }
  func.func @transform_4(%arg0: i32) -> (i32, i32) {
    %c0_i32 = arith.constant 0 : i32
    %c0_i32_0 = arith.constant 0 : i32
    %c0_i32_1 = arith.constant 0 : i32
    return %c0_i32, %c0_i32_0 : i32, i32
  }
  func.func @transform_5(%arg0: i32) -> (i32, i32) {
    %c0_i32 = arith.constant 0 : i32
    %c0_i32_0 = arith.constant 0 : i32
    %c0_i32_1 = arith.constant 0 : i32
    return %c0_i32, %c0_i32_0 : i32, i32
  }
  func.func @transform_6(%arg0: i32) -> (i32, i32) {
    %c0_i32 = arith.constant 0 : i32
    %c0_i32_0 = arith.constant 0 : i32
    %c0_i32_1 = arith.constant 0 : i32
    return %c0_i32, %c0_i32_0 : i32, i32
  }
  func.func @transform_7(%arg0: i32) -> (i32, i32) {
    %c0_i32 = arith.constant 0 : i32
    %c0_i32_0 = arith.constant 0 : i32
    %c0_i32_1 = arith.constant 0 : i32
    return %c0_i32, %c0_i32_0 : i32, i32
  }
  func.func @transform_8(%arg0: i32) -> (i32, i32) {
    %c0_i32 = arith.constant 0 : i32
    %c0_i32_0 = arith.constant 0 : i32
    %c0_i32_1 = arith.constant 0 : i32
    return %c0_i32, %c0_i32_0 : i32, i32
  }
  func.func @transform_9(%arg0: i32) -> (i32, i32) {
    %c0_i32 = arith.constant 0 : i32
    %c0_i32_0 = arith.constant 0 : i32
    %c0_i32_1 = arith.constant 0 : i32
    return %c0_i32, %c0_i32_0 : i32, i32
  }
  func.func @transform_10(%arg0: i32) -> (i32, i32) {
    %c0_i32 = arith.constant 0 : i32
    %c0_i32_0 = arith.constant 0 : i32
    %c0_i32_1 = arith.constant 0 : i32
    return %c0_i32, %c0_i32_0 : i32, i32
  }
  func.func @transform_11(%arg0: i32) -> (i32, i32) {
    %c0_i32 = arith.constant 0 : i32
    %c0_i32_0 = arith.constant 0 : i32
    %c0_i32_1 = arith.constant 0 : i32
    return %c0_i32, %c0_i32_0 : i32, i32
  }
  func.func @transform_12(%arg0: i32) -> (i32, i32, i32) {
    %c0_i32 = arith.constant 0 : i32
    %c0_i32_0 = arith.constant 0 : i32
    %c0_i32_1 = arith.constant 0 : i32
    return %arg0, %c0_i32, %c0_i32_0 : i32, i32, i32
  }
  func.func @transform_13(%arg0: i32) -> (i32, i32, i32) {
    %c0_i32 = arith.constant 0 : i32
    %c0_i32_0 = arith.constant 0 : i32
    %c0_i32_1 = arith.constant 0 : i32
    return %arg0, %c0_i32, %c0_i32_0 : i32, i32, i32
  }
  func.func @transform_14(%arg0: i32) -> (i32, i32, i32) {
    %c0_i32 = arith.constant 0 : i32
    %c0_i32_0 = arith.constant 0 : i32
    %c0_i32_1 = arith.constant 0 : i32
    return %arg0, %c0_i32, %c0_i32_0 : i32, i32, i32
  }
}

</mosaic_0001>

<llo_original>
// kernel: tpu_custom_call.1
$region0: #{tpu_custom_call.1}
  #allocation0 [shape = 'u32[]', space=smem, size = 0x4, offset = 0x4, fixed_abs, tag = 'smem constant byte address 0x4 - core index']
  #allocation1 [shape = 'u32[144,128]{1,0:T(1,128)}', space=vmem, size = 0x12000, scoped, tag = 'internal scratch']
  #allocation2 [shape = 'f32[64,128]{1,0:T(8,128)}', space=vmem, size = 0x8000, scoped, tag = 'scratch operand']
  #allocation3 [shape = 'f32[64,32]{1,0:T(8,128)}', space=vmem, size = 0x8000, scoped, tag = 'scratch operand']
  #allocation4 [shape = 'f32[1,1]{1,0:T(1,128)S(1)}', space=vmem, size = 0x200, scoped, tag = 'scoped memory for tpu_custom_call.1']
  %s0 = inlined_call_operand.vmem [shape: f32[1,64,16], index: 0, kind: input, shape index: {}]
  %s1 = inlined_call_operand.vmem [shape: f32[1,8,32], index: 1, kind: input, shape index: {}]
  %s2 = inlined_call_operand.vmem [shape: f32[1,8,32], index: 2, kind: input, shape index: {}]
  %s3 = inlined_call_operand.vmem [shape: f32[16,128], index: 3, kind: input, shape index: {}]
  %s4 = inlined_call_operand.vmem [shape: f32[32,128], index: 4, kind: input, shape index: {}]
  %s5 = inlined_call_operand.vmem [shape: f32[1,128], index: 5, kind: input, shape index: {}]
  %s6 = inlined_call_operand.vmem [shape: f32[32,64], index: 6, kind: input, shape index: {}]
  %s7 = inlined_call_operand.vmem [shape: f32[1,64], index: 7, kind: input, shape index: {}]
  %s8 = inlined_call_operand.vmem [shape: f32[64,32], index: 8, kind: input, shape index: {}]
  %s9 = inlined_call_operand.vmem [shape: f32[1,32], index: 9, kind: input, shape index: {}]
  %s10 = inlined_call_operand.vmem [shape: f32[1,32], index: 10, kind: input, shape index: {}]
  %s11 = inlined_call_operand.<no memory space> [shape: f32[1,1], index: 11, kind: input, shape index: {}]
  %s12 = inlined_call_operand.vmem [shape: f32[1,64,1], index: 12, kind: output, shape index: {0}]
  %s13 = inlined_call_operand.hbm [shape: f32[1,8,32], index: 13, kind: output, shape index: {1}]
  %s14 = inlined_call_operand.hbm [shape: f32[1,8,32], index: 14, kind: output, shape index: {2}]
  %15 = xla_tuple %s12, %s13, %s14
  %s16 = sld [smem:[#allocation0]]
  $region74: #{tpu_custom_call.1} parent=0
    _
  %s18 = ssub.s32 1, %s16
  %s19 = scalar_select 0, %s18, %s16
  %v20 = vstv %s11
  %21 = vst [vmem:[#allocation4] sm:$0x1] %v20
  $region1: #{tpu_custom_call.1} parent=0
    #allocation5 [shape = 'u8[4096]{0}', space=vmem, size = 0x1000, scoped, tag = 'output window, operand 1, single buffered']
    #allocation6 [shape = 's32[1]{0}', space=sflag, size = 0x4, scoped, tag = 'scoped memory for tpu_custom_call.1']
    #allocation7 [shape = 'u8[4096]{0}', space=vmem, size = 0x1000, scoped, tag = 'output window, operand 2, single buffered']
    #allocation8 [shape = 's32[1]{0}', space=sflag, size = 0x4, scoped, tag = 'scoped memory for tpu_custom_call.1']
    %22 = vsyncpa [#allocation6], 0
    %23 = vsyncpa [#allocation8], 0
    // Predicated region
    $region2: #{tpu_custom_call.1} parent=1 // pred_check
      _
    $region3: #{tpu_custom_call.1} parent=1 // pred_check_branch
      %25 = sbr.rel (0) target = $region5
    $region4: #{tpu_custom_call.1} parent=1 // pred_region
      _
    $region5: #{tpu_custom_call.1} parent=1 // pred_fallthru
      _
    // Predicated region
    $region6: #{tpu_custom_call.1} parent=1 // pred_check
      _
    $region7: #{tpu_custom_call.1} parent=1 // pred_check_branch
      %27 = sbr.rel (0) target = $region9
    $region8: #{tpu_custom_call.1} parent=1 // pred_region
      _
    $region9: #{tpu_custom_call.1} parent=1 // pred_fallthru
      _
    // Predicated region
    $region10: #{tpu_custom_call.1} parent=1 // pred_check
      _
    $region11: #{tpu_custom_call.1} parent=1 // pred_check_branch
      %29 = sbr.rel (0) target = $region13
    $region12: #{tpu_custom_call.1} parent=1 // pred_region
      _
    $region13: #{tpu_custom_call.1} parent=1 // pred_fallthru
      _
    // Predicated region
    $region14: #{tpu_custom_call.1} parent=1 // pred_check
      _
    $region15: #{tpu_custom_call.1} parent=1 // pred_check_branch
      %31 = sbr.rel (0) target = $region17
    $region16: #{tpu_custom_call.1} parent=1 // pred_region
      _
    $region17: #{tpu_custom_call.1} parent=1 // pred_fallthru
      _
    // Predicated region
    $region18: #{tpu_custom_call.1} parent=1 // pred_check
      _
    $region19: #{tpu_custom_call.1} parent=1 // pred_check_branch
      %33 = sbr.rel (0) target = $region21
    $region20: #{tpu_custom_call.1} parent=1 // pred_region
      _
    $region21: #{tpu_custom_call.1} parent=1 // pred_fallthru
      _
    // Predicated region
    $region22: #{tpu_custom_call.1} parent=1 // pred_check
      _
    $region23: #{tpu_custom_call.1} parent=1 // pred_check_branch
      %35 = sbr.rel (0) target = $region25
    $region24: #{tpu_custom_call.1} parent=1 // pred_region
      _
    $region25: #{tpu_custom_call.1} parent=1 // pred_fallthru
      _
    // Predicated region
    $region26: #{tpu_custom_call.1} parent=1 // pred_check
      _
    $region27: #{tpu_custom_call.1} parent=1 // pred_check_branch
      %37 = sbr.rel (0) target = $region29
    $region28: #{tpu_custom_call.1} parent=1 // pred_region
      _
    $region29: #{tpu_custom_call.1} parent=1 // pred_fallthru
      _
    // Predicated region
    $region30: #{tpu_custom_call.1} parent=1 // pred_check
      _
    $region31: #{tpu_custom_call.1} parent=1 // pred_check_branch
      %39 = sbr.rel (0) target = $region33
    $region32: #{tpu_custom_call.1} parent=1 // pred_region
      _
    $region33: #{tpu_custom_call.1} parent=1 // pred_fallthru
      _
    // Predicated region
    $region34: #{tpu_custom_call.1} parent=1 // pred_check
      _
    $region35: #{tpu_custom_call.1} parent=1 // pred_check_branch
      %41 = sbr.rel (0) target = $region37
    $region36: #{tpu_custom_call.1} parent=1 // pred_region
      _
    $region37: #{tpu_custom_call.1} parent=1 // pred_fallthru
      _
    // Predicated region
    $region38: #{tpu_custom_call.1} parent=1 // pred_check
      _
    $region39: #{tpu_custom_call.1} parent=1 // pred_check_branch
      %43 = sbr.rel (0) target = $region41
    $region40: #{tpu_custom_call.1} parent=1 // pred_region
      _
    $region41: #{tpu_custom_call.1} parent=1 // pred_fallthru
      _
    // Predicated region
    $region42: #{tpu_custom_call.1} parent=1 // pred_check
      _
    $region43: #{tpu_custom_call.1} parent=1 // pred_check_branch
      %45 = sbr.rel (0) target = $region45
    $region44: #{tpu_custom_call.1} parent=1 // pred_region
      _
    $region45: #{tpu_custom_call.1} parent=1 // pred_fallthru
      _
    // Predicated region
    $region46: #{tpu_custom_call.1} parent=1 // pred_check
      _
    $region47: #{tpu_custom_call.1} parent=1 // pred_check_branch
      %47 = sbr.rel (0) target = $region49
    $region48: #{tpu_custom_call.1} parent=1 // pred_region
      _
    $region49: #{tpu_custom_call.1} parent=1 // pred_fallthru
      _
    %v48 = vld [vmem:[%s0] sm:$0xff]
    %v49 = vld [vmem:[%s0 + $0x8] sm:$0xff]
    %v50 = vld [vmem:[%s0 + $0x10] sm:$0xff]
    %v51 = vld [vmem:[%s0 + $0x18] sm:$0xff]
    %v52 = vld [vmem:[%s0 + $0x20] sm:$0xff]
    %v53 = vld [vmem:[%s0 + $0x28] sm:$0xff]
    %v54 = vld [vmem:[%s0 + $0x30] sm:$0xff]
    %v55 = vld [vmem:[%s0 + $0x38] sm:$0xff]
    %v56 = vld [vmem:[%s3] sm:$0xff]
    %v57 = vld [vmem:[%s3 + $0x8] sm:$0xff]
    %v58 = vld [vmem:[%s5] sm:$0x1]
    %v60 = vlaneseq
    %v61 = vshrl.u32 %v60, 7
    %v62 = vsub.s32 0, %v61
    %v63 = vrot.slane %v58, %v62
    %vm65 = vcmask 130048
    %v67 = vsel %vm65, %v48, 0
    %v70 = vsel %vm65, %v49, 0
    %v73 = vsel %vm65, %v50, 0
    %v76 = vsel %vm65, %v51, 0
    %v79 = vsel %vm65, %v52, 0
    %v82 = vsel %vm65, %v53, 0
    %v85 = vsel %vm65, %v54, 0
    %v88 = vsel %vm65, %v55, 0
    %90 = vmatprep.subr.mxu0 0.0
    %91 = vmatpush1.msra.mxu0 %v56
    %92 = vmatprep.subr.mxu0 0.0
    %93 = vmatpush1.msra.mxu0 %v57
    %94 = vmatprep.subr.mxu0 0.0
    %95 = vmatpush1.msra.mxu0 0.0
    %96 = vmatprep.subr.mxu0 0.0
    %97 = vmatpush1.msra.mxu0 0.0
    %98 = vmatprep.subr.mxu0 0.0
    %99 = vmatpush1.msra.mxu0 0.0
    %100 = vmatprep.subr.mxu0 0.0
    %101 = vmatpush1.msra.mxu0 0.0
    %102 = vmatprep.subr.mxu0 0.0
    %103 = vmatpush1.msra.mxu0 0.0
    %104 = vmatprep.subr.mxu0 0.0
    %105 = vmatpush1.msra.mxu0 0.0
    %106 = vmatprep.subr.mxu0 0.0
    %107 = vmatpush1.msra.mxu0 0.0
    %108 = vmatprep.subr.mxu0 0.0
    %109 = vmatpush1.msra.mxu0 0.0
    %110 = vmatprep.subr.mxu0 0.0
    %111 = vmatpush1.msra.mxu0 0.0
    %112 = vmatprep.subr.mxu0 0.0
    %113 = vmatpush1.msra.mxu0 0.0
    %114 = vmatprep.subr.mxu0 0.0
    %115 = vmatpush1.msra.mxu0 0.0
    %116 = vmatprep.subr.mxu0 0.0
    %117 = vmatpush1.msra.mxu0 0.0
    %118 = vmatprep.subr.mxu0 0.0
    %119 = vmatpush1.msra.mxu0 0.0
    %120 = vmatprep.subr.mxu0 0.0
    %121 = vmatpush1.msra.mxu0 0.0
    %122 = vmatprep.subr.mxu0 0.0
    %123 = vmatpush1.msra.mxu0 0.0
    %124 = vmatprep.subr.mxu0 0.0
    %125 = vmatpush1.msra.mxu0 0.0
    %126 = vmatprep.subr.mxu0 0.0
    %127 = vmatpush1.msra.mxu0 0.0
    %128 = vmatprep.subr.mxu0 0.0
    %129 = vmatpush1.msra.mxu0 0.0
    %130 = vmatprep.subr.mxu0 0.0
    %131 = vmatpush1.msra.mxu0 0.0
    %132 = vmatprep.subr.mxu0 0.0
    %133 = vmatpush1.msra.mxu0 0.0
    %134 = vmatprep.subr.mxu0 0.0
    %135 = vmatpush1.msra.mxu0 0.0
    %136 = vmatprep.subr.mxu0 0.0
    %137 = vmatpush1.msra.mxu0 0.0
    %138 = vmatprep.subr.mxu0 0.0
    %139 = vmatpush1.msra.mxu0 0.0
    %140 = vmatprep.subr.mxu0 0.0
    %141 = vmatpush1.msra.mxu0 0.0
    %142 = vmatprep.subr.mxu0 0.0
    %143 = vmatpush1.msra.mxu0 0.0
    %144 = vmatprep.subr.mxu0 0.0
    %145 = vmatpush1.msra.mxu0 0.0
    %146 = vmatprep.subr.mxu0 0.0
    %147 = vmatpush1.msra.mxu0 0.0
    %148 = vmatprep.subr.mxu0 0.0
    %149 = vmatpush1.msra.mxu0 0.0
    %150 = vmatprep.subr.mxu0 0.0
    %151 = vmatpush1.msra.mxu0 0.0
    %152 = vmatprep.subr.mxu0 0.0
    %153 = vmatpush1.msra.mxu0 0.0
    %154 = vmatprep.mubr.f32.mxu0 0.0
    %155 = vmatmul.mubr.f32.gmra.mrb[0].mxu0 %v67
    %v156 = vpop.f32.mrb[0].mxu0
    %v157 = vadd.f32 %v63, %v156
    %v158 = vpop.f32.mrb[0].mxu0
    %159 = vmatprep.mubr.f32.mxu0 0.0
    %160 = vmatmul.mubr.f32.gmra.mrb[0].mxu0 %v70
    %v161 = vpop.f32.mrb[0].mxu0
    %v162 = vadd.f32 %v63, %v161
    %v163 = vpop.f32.mrb[0].mxu0
    %164 = vmatprep.mubr.f32.mxu0 0.0
    %165 = vmatmul.mubr.f32.gmra.mrb[0].mxu0 %v73
    %v166 = vpop.f32.mrb[0].mxu0
    %v167 = vadd.f32 %v63, %v166
    %v168 = vpop.f32.mrb[0].mxu0
    %169 = vmatprep.mubr.f32.mxu0 0.0
    %170 = vmatmul.mubr.f32.gmra.mrb[0].mxu0 %v76
    %v171 = vpop.f32.mrb[0].mxu0
    %v172 = vadd.f32 %v63, %v171
    %v173 = vpop.f32.mrb[0].mxu0
    %174 = vmatprep.mubr.f32.mxu0 0.0
    %175 = vmatmul.mubr.f32.gmra.mrb[0].mxu0 %v79
    %v176 = vpop.f32.mrb[0].mxu0
    %v177 = vadd.f32 %v63, %v176
    %v178 = vpop.f32.mrb[0].mxu0
    %179 = vmatprep.mubr.f32.mxu0 0.0
    %180 = vmatmul.mubr.f32.gmra.mrb[0].mxu0 %v82
    %v181 = vpop.f32.mrb[0].mxu0
    %v182 = vadd.f32 %v63, %v181
    %v183 = vpop.f32.mrb[0].mxu0
    %184 = vmatprep.mubr.f32.mxu0 0.0
    %185 = vmatmul.mubr.f32.gmra.mrb[0].mxu0 %v85
    %v186 = vpop.f32.mrb[0].mxu0
    %v187 = vadd.f32 %v63, %v186
    %v188 = vpop.f32.mrb[0].mxu0
    %189 = vmatprep.mubr.f32.mxu0 0.0
    %190 = vmatmul.mubr.f32.gmra.mrb[0].mxu0 %v88
    %v191 = vpop.f32.mrb[0].mxu0
    %v192 = vadd.f32 %v63, %v191
    %v193 = vpop.f32.mrb[0].mxu0
    %194 = vdwg.mxu0
    %195 = vst [vmem:[#allocation2] sm:$0xff] %v157
    %196 = vst [vmem:[#allocation2 + $0x8] sm:$0xff] %v162
    %197 = vst [vmem:[#allocation2 + $0x10] sm:$0xff] %v167
    %198 = vst [vmem:[#allocation2 + $0x18] sm:$0xff] %v172
    %199 = vst [vmem:[#allocation2 + $0x20] sm:$0xff] %v177
    %200 = vst [vmem:[#allocation2 + $0x28] sm:$0xff] %v182
    %201 = vst [vmem:[#allocation2 + $0x30] sm:$0xff] %v187
    %202 = vst [vmem:[#allocation2 + $0x38] sm:$0xff] %v192
    %v203 = vld [vmem:[%s4] sm:$0xff]
    %v204 = vld [vmem:[%s4 + $0x8] sm:$0xff]
    %v205 = vld [vmem:[%s4 + $0x10] sm:$0xff]
    %v206 = vld [vmem:[%s4 + $0x18] sm:$0xff]
    %v207 = vld [vmem:[%s1] sm:$0xff]
    %v208 = vld [vmem:[%s2] sm:$0xff]
    %v209 = vld [vmem:[#allocation2] sm:$0xff]
    %vm210 = vcmask 261120
    %v212 = vsel %vm210, %v207, 0
    %214 = vmatprep.subr.mxu0 0.0
    %215 = vmatpush1.msra.mxu0 %v203
    %216 = vmatprep.subr.mxu0 0.0
    %217 = vmatpush1.msra.mxu0 %v204
    %218 = vmatprep.subr.mxu0 0.0
    %219 = vmatpush1.msra.mxu0 %v205
    %220 = vmatprep.subr.mxu0 0.0
    %221 = vmatpush1.msra.mxu0 %v206
    %222 = vmatprep.subr.mxu0 0.0
    %223 = vmatpush1.msra.mxu0 0.0
    %224 = vmatprep.subr.mxu0 0.0
    %225 = vmatpush1.msra.mxu0 0.0
    %226 = vmatprep.subr.mxu0 0.0
    %227 = vmatpush1.msra.mxu0 0.0
    %228 = vmatprep.subr.mxu0 0.0
    %229 = vmatpush1.msra.mxu0 0.0
    %230 = vmatprep.subr.mxu0 0.0
    %231 = vmatpush1.msra.mxu0 0.0
    %232 = vmatprep.subr.mxu0 0.0
    %233 = vmatpush1.msra.mxu0 0.0
    %234 = vmatprep.subr.mxu0 0.0
    %235 = vmatpush1.msra.mxu0 0.0
    %236 = vmatprep.subr.mxu0 0.0
    %237 = vmatpush1.msra.mxu0 0.0
    %238 = vmatprep.subr.mxu0 0.0
    %239 = vmatpush1.msra.mxu0 0.0
    %240 = vmatprep.subr.mxu0 0.0
    %241 = vmatpush1.msra.mxu0 0.0
    %242 = vmatprep.subr.mxu0 0.0
    %243 = vmatpush1.msra.mxu0 0.0
    %244 = vmatprep.subr.mxu0 0.0
    %245 = vmatpush1.msra.mxu0 0.0
    %246 = vmatprep.subr.mxu0 0.0
    %247 = vmatpush1.msra.mxu0 0.0
    %248 = vmatprep.subr.mxu0 0.0
    %249 = vmatpush1.msra.mxu0 0.0
    %250 = vmatprep.subr.mxu0 0.0
    %251 = vmatpush1.msra.mxu0 0.0
    %252 = vmatprep.subr.mxu0 0.0
    %253 = vmatpush1.msra.mxu0 0.0
    %254 = vmatprep.subr.mxu0 0.0
    %255 = vmatpush1.msra.mxu0 0.0
    %256 = vmatprep.subr.mxu0 0.0
    %257 = vmatpush1.msra.mxu0 0.0
    %258 = vmatprep.subr.mxu0 0.0
    %259 = vmatpush1.msra.mxu0 0.0
    %260 = vmatprep.subr.mxu0 0.0
    %261 = vmatpush1.msra.mxu0 0.0
    %262 = vmatprep.subr.mxu0 0.0
    %263 = vmatpush1.msra.mxu0 0.0
    %264 = vmatprep.subr.mxu0 0.0
    %265 = vmatpush1.msra.mxu0 0.0
    %266 = vmatprep.subr.mxu0 0.0
    %267 = vmatpush1.msra.mxu0 0.0
    %268 = vmatprep.subr.mxu0 0.0
    %269 = vmatpush1.msra.mxu0 0.0
    %270 = vmatprep.subr.mxu0 0.0
    %271 = vmatpush1.msra.mxu0 0.0
    %272 = vmatprep.subr.mxu0 0.0
    %273 = vmatpush1.msra.mxu0 0.0
    %274 = vmatprep.subr.mxu0 0.0
    %275 = vmatpush1.msra.mxu0 0.0
    %276 = vmatprep.subr.mxu0 0.0
    %277 = vmatpush1.msra.mxu0 0.0
    %278 = vmatprep.mubr.f32.mxu0 0.0
    %279 = vmatmul.mubr.f32.gmra.mrb[0].mxu0 %v212
    %v280 = vpop.f32.mrb[0].mxu0
    %v281 = vadd.f32 0.0, %v280
    %v282 = vpop.f32.mrb[0].mxu0
    %283 = vdwg.mxu0
    %v284 = vadd.f32 %v209, %v281
    %v285 = vxor.u32 %v284, 2147483648
    %v286 = vmul.f32 %v285, 1.442695
    %v287 = vpow.pop %v286
    %v288 = vadd.f32 %v287, 1.0
    %v289 = vrcp.pop %v288
    %v290 = vmul.f32 1.0, %v289
    %v291 = vtanh.pop %v284
    %293 = vrot.lane.b32.xlu0 %v208, 32
    %v294 = vpop.permute.xlu0 %293
    %v296 = vmul.f32 %v290, %v294
    %298 = vrot.lane.b32.xlu0 %v291, 64
    %v299 = vpop.permute.xlu0 %298
    %v301 = vmul.f32 %v290, %v299
    %303 = vrot.lane.b32.xlu0 %v301, 32
    %v304 = vpop.permute.xlu0 %303
    %v306 = vadd.f32 %v296, %v304
    %v307 = vtanh.pop %v306
    %309 = vrot.lane.b32.xlu0 %v307, 64
    %v310 = vpop.permute.xlu0 %309
    %v312 = vmul.f32 %v290, %v310
    %314 = vrot.lane.b32.xlu0 %v312, 32
    %v315 = vpop.permute.xlu0 %314
    %317 = vst.msk [vmem:[#allocation3] sm:$0xff] %vm210, %v315
    %v318 = vld [vmem:[#allocation2 + $0x8] sm:$0xff]
    %v319 = vsel %vm210, %v315, 0
    %321 = vmatprep.subr.mxu0 0.0
    %322 = vmatpush1.msra.mxu0 %v203
    %323 = vmatprep.subr.mxu0 0.0
    %324 = vmatpush1.msra.mxu0 %v204
    %325 = vmatprep.subr.mxu0 0.0
    %326 = vmatpush1.msra.mxu0 %v205
    %327 = vmatprep.subr.mxu0 0.0
    %328 = vmatpush1.msra.mxu0 %v206
    %329 = vmatprep.subr.mxu0 0.0
    %330 = vmatpush1.msra.mxu0 0.0
    %331 = vmatprep.subr.mxu0 0.0
    %332 = vmatpush1.msra.mxu0 0.0
    %333 = vmatprep.subr.mxu0 0.0
    %334 = vmatpush1.msra.mxu0 0.0
    %335 = vmatprep.subr.mxu0 0.0
    %336 = vmatpush1.msra.mxu0 0.0
    %337 = vmatprep.subr.mxu0 0.0
    %338 = vmatpush1.msra.mxu0 0.0
    %339 = vmatprep.subr.mxu0 0.0
    %340 = vmatpush1.msra.mxu0 0.0
    %341 = vmatprep.subr.mxu0 0.0
    %342 = vmatpush1.msra.mxu0 0.0
    %343 = vmatprep.subr.mxu0 0.0
    %344 = vmatpush1.msra.mxu0 0.0
    %345 = vmatprep.subr.mxu0 0.0
    %346 = vmatpush1.msra.mxu0 0.0
    %347 = vmatprep.subr.mxu0 0.0
    %348 = vmatpush1.msra.mxu0 0.0
    %349 = vmatprep.subr.mxu0 0.0
    %350 = vmatpush1.msra.mxu0 0.0
    %351 = vmatprep.subr.mxu0 0.0
    %352 = vmatpush1.msra.mxu0 0.0
    %353 = vmatprep.subr.mxu0 0.0
    %354 = vmatpush1.msra.mxu0 0.0
    %355 = vmatprep.subr.mxu0 0.0
    %356 = vmatpush1.msra.mxu0 0.0
    %357 = vmatprep.subr.mxu0 0.0
    %358 = vmatpush1.msra.mxu0 0.0
    %359 = vmatprep.subr.mxu0 0.0
    %360 = vmatpush1.msra.mxu0 0.0
    %361 = vmatprep.subr.mxu0 0.0
    %362 = vmatpush1.msra.mxu0 0.0
    %363 = vmatprep.subr.mxu0 0.0
    %364 = vmatpush1.msra.mxu0 0.0
    %365 = vmatprep.subr.mxu0 0.0
    %366 = vmatpush1.msra.mxu0 0.0
    %367 = vmatprep.subr.mxu0 0.0
    %368 = vmatpush1.msra.mxu0 0.0
    %369 = vmatprep.subr.mxu0 0.0
    %370 = vmatpush1.msra.mxu0 0.0
    %371 = vmatprep.subr.mxu0 0.0
    %372 = vmatpush1.msra.mxu0 0.0
    %373 = vmatprep.subr.mxu0 0.0
    %374 = vmatpush1.msra.mxu0 0.0
    %375 = vmatprep.subr.mxu0 0.0
    %376 = vmatpush1.msra.mxu0 0.0
    %377 = vmatprep.subr.mxu0 0.0
    %378 = vmatpush1.msra.mxu0 0.0
    %379 = vmatprep.subr.mxu0 0.0
    %380 = vmatpush1.msra.mxu0 0.0
    %381 = vmatprep.subr.mxu0 0.0
    %382 = vmatpush1.msra.mxu0 0.0
    %383 = vmatprep.subr.mxu0 0.0
    %384 = vmatpush1.msra.mxu0 0.0
    %385 = vmatprep.mubr.f32.mxu0 0.0
    %386 = vmatmul.mubr.f32.gmra.mrb[0].mxu0 %v319
    %v387 = vpop.f32.mrb[0].mxu0
    %v388 = vadd.f32 0.0, %v387
    %v389 = vpop.f32.mrb[0].mxu0
    %390 = vdwg.mxu0
    %v391 = vadd.f32 %v318, %v388
    %v392 = vxor.u32 %v391, 2147483648
    %v393 = vmul.f32 %v392, 1.442695
    %v394 = vpow.pop %v393
    %v395 = vadd.f32 %v394, 1.0
    %v396 = vrcp.pop %v395
    %v397 = vmul.f32 1.0, %v396
    %v398 = vtanh.pop %v391
    %v399 = vmul.f32 %v397, %v306
    %401 = vrot.lane.b32.xlu0 %v398, 64
    %v402 = vpop.permute.xlu0 %401
    %v404 = vmul.f32 %v397, %v402
    %406 = vrot.lane.b32.xlu0 %v404, 32
    %v407 = vpop.permute.xlu0 %406
    %v409 = vadd.f32 %v399, %v407
    %v410 = vtanh.pop %v409
    %412 = vrot.lane.b32.xlu0 %v410, 64
    %v413 = vpop.permute.xlu0 %412
    %v415 = vmul.f32 %v397, %v413
    %417 = vrot.lane.b32.xlu0 %v415, 32
    %v418 = vpop.permute.xlu0 %417
    %420 = vst.msk [vmem:[#allocation3 + $0x8] sm:$0xff] %vm210, %v418
    %v421 = vld [vmem:[#allocation2 + $0x10] sm:$0xff]
    %v422 = vsel %vm210, %v418, 0
    %424 = vmatprep.subr.mxu0 0.0
    %425 = vmatpush1.msra.mxu0 %v203
    %426 = vmatprep.subr.mxu0 0.0
    %427 = vmatpush1.msra.mxu0 %v204
    %428 = vmatprep.subr.mxu0 0.0
    %429 = vmatpush1.msra.mxu0 %v205
    %430 = vmatprep.subr.mxu0 0.0
    %431 = vmatpush1.msra.mxu0 %v206
    %432 = vmatprep.subr.mxu0 0.0
    %433 = vmatpush1.msra.mxu0 0.0
    %434 = vmatprep.subr.mxu0 0.0
    %435 = vmatpush1.msra.mxu0 0.0
    %436 = vmatprep.subr.mxu0 0.0
    %437 = vmatpush1.msra.mxu0 0.0
    %438 = vmatprep.subr.mxu0 0.0
    %439 = vmatpush1.msra.mxu0 0.0
    %440 = vmatprep.subr.mxu0 0.0
    %441 = vmatpush1.msra.mxu0 0.0
    %442 = vmatprep.subr.mxu0 0.0
    %443 = vmatpush1.msra.mxu0 0.0
    %444 = vmatprep.subr.mxu0 0.0
    %445 = vmatpush1.msra.mxu0 0.0
    %446 = vmatprep.subr.mxu0 0.0
    %447 = vmatpush1.msra.mxu0 0.0
    %448 = vmatprep.subr.mxu0 0.0
    %449 = vmatpush1.msra.mxu0 0.0
    %450 = vmatprep.subr.mxu0 0.0
    %451 = vmatpush1.msra.mxu0 0.0
    %452 = vmatprep.subr.mxu0 0.0
    %453 = vmatpush1.msra.mxu0 0.0
    %454 = vmatprep.subr.mxu0 0.0
    %455 = vmatpush1.msra.mxu0 0.0
    %456 = vmatprep.subr.mxu0 0.0
    %457 = vmatpush1.msra.mxu0 0.0
    %458 = vmatprep.subr.mxu0 0.0
    %459 = vmatpush1.msra.mxu0 0.0
    %460 = vmatprep.subr.mxu0 0.0
    %461 = vmatpush1.msra.mxu0 0.0
    %462 = vmatprep.subr.mxu0 0.0
    %463 = vmatpush1.msra.mxu0 0.0
    %464 = vmatprep.subr.mxu0 0.0
    %465 = vmatpush1.msra.mxu0 0.0
    %466 = vmatprep.subr.mxu0 0.0
    %467 = vmatpush1.msra.mxu0 0.0
    %468 = vmatprep.subr.mxu0 0.0
    %469 = vmatpush1.msra.mxu0 0.0
    %470 = vmatprep.subr.mxu0 0.0
    %471 = vmatpush1.msra.mxu0 0.0
    %472 = vmatprep.subr.mxu0 0.0
    %473 = vmatpush1.msra.mxu0 0.0
    %474 = vmatprep.subr.mxu0 0.0
    %475 = vmatpush1.msra.mxu0 0.0
    %476 = vmatprep.subr.mxu0 0.0
    %477 = vmatpush1.msra.mxu0 0.0
    %478 = vmatprep.subr.mxu0 0.0
    %479 = vmatpush1.msra.mxu0 0.0
    %480 = vmatprep.subr.mxu0 0.0
    %481 = vmatpush1.msra.mxu0 0.0
    %482 = vmatprep.subr.mxu0 0.0
    %483 = vmatpush1.msra.mxu0 0.0
    %484 = vmatprep.subr.mxu0 0.0
    %485 = vmatpush1.msra.mxu0 0.0
    %486 = vmatprep.subr.mxu0 0.0
    %487 = vmatpush1.msra.mxu0 0.0
    %488 = vmatprep.mubr.f32.mxu0 0.0
    %489 = vmatmul.mubr.f32.gmra.mrb[0].mxu0 %v422
    %v490 = vpop.f32.mrb[0].mxu0
    %v491 = vadd.f32 0.0, %v490
    %v492 = vpop.f32.mrb[0].mxu0
    %493 = vdwg.mxu0
    %v494 = vadd.f32 %v421, %v491
    %v495 = vxor.u32 %v494, 2147483648
    %v496 = vmul.f32 %v495, 1.442695
    %v497 = vpow.pop %v496
    %v498 = vadd.f32 %v497, 1.0
    %v499 = vrcp.pop %v498
    %v500 = vmul.f32 1.0, %v499
    %v501 = vtanh.pop %v494
    %v502 = vmul.f32 %v500, %v409
    %504 = vrot.lane.b32.xlu0 %v501, 64
    %v505 = vpop.permute.xlu0 %504
    %v507 = vmul.f32 %v500, %v505
    %509 = vrot.lane.b32.xlu0 %v507, 32
    %v510 = vpop.permute.xlu0 %509
    %v512 = vadd.f32 %v502, %v510
    %v513 = vtanh.pop %v512
    %515 = vrot.lane.b32.xlu0 %v513, 64
    %v516 = vpop.permute.xlu0 %515
    %v518 = vmul.f32 %v500, %v516
    %520 = vrot.lane.b32.xlu0 %v518, 32
    %v521 = vpop.permute.xlu0 %520
    %523 = vst.msk [vmem:[#allocation3 + $0x10] sm:$0xff] %vm210, %v521
    %v524 = vld [vmem:[#allocation2 + $0x18] sm:$0xff]
    %v525 = vsel %vm210, %v521, 0
    %527 = vmatprep.subr.mxu0 0.0
    %528 = vmatpush1.msra.mxu0 %v203
    %529 = vmatprep.subr.mxu0 0.0
    %530 = vmatpush1.msra.mxu0 %v204
    %531 = vmatprep.subr.mxu0 0.0
    %532 = vmatpush1.msra.mxu0 %v205
    %533 = vmatprep.subr.mxu0 0.0
    %534 = vmatpush1.msra.mxu0 %v206
    %535 = vmatprep.subr.mxu0 0.0
    %536 = vmatpush1.msra.mxu0 0.0
    %537 = vmatprep.subr.mxu0 0.0
    %538 = vmatpush1.msra.mxu0 0.0
    %539 = vmatprep.subr.mxu0 0.0
    %540 = vmatpush1.msra.mxu0 0.0
    %541 = vmatprep.subr.mxu0 0.0
    %542 = vmatpush1.msra.mxu0 0.0
    %543 = vmatprep.subr.mxu0 0.0
    %544 = vmatpush1.msra.mxu0 0.0
    %545 = vmatprep.subr.mxu0 0.0
    %546 = vmatpush1.msra.mxu0 0.0
    %547 = vmatprep.subr.mxu0 0.0
    %548 = vmatpush1.msra.mxu0 0.0
    %549 = vmatprep.subr.mxu0 0.0
    %550 = vmatpush1.msra.mxu0 0.0
    %551 = vmatprep.subr.mxu0 0.0
    %552 = vmatpush1.msra.mxu0 0.0
    %553 = vmatprep.subr.mxu0 0.0
    %554 = vmatpush1.msra.mxu0 0.0
    %555 = vmatprep.subr.mxu0 0.0
    %556 = vmatpush1.msra.mxu0 0.0
    %557 = vmatprep.subr.mxu0 0.0
    %558 = vmatpush1.msra.mxu0 0.0
    %559 = vmatprep.subr.mxu0 0.0
    %560 = vmatpush1.msra.mxu0 0.0
    %561 = vmatprep.subr.mxu0 0.0
    %562 = vmatpush1.msra.mxu0 0.0
    %563 = vmatprep.subr.mxu0 0.0
    %564 = vmatpush1.msra.mxu0 0.0
    %565 = vmatprep.subr.mxu0 0.0
    %566 = vmatpush1.msra.mxu0 0.0
    %567 = vmatprep.subr.mxu0 0.0
    %568 = vmatpush1.msra.mxu0 0.0
    %569 = vmatprep.subr.mxu0 0.0
    %570 = vmatpush1.msra.mxu0 0.0
    %571 = vmatprep.subr.mxu0 0.0
    %572 = vmatpush1.msra.mxu0 0.0
    %573 = vmatprep.subr.mxu0 0.0
    %574 = vmatpush1.msra.mxu0 0.0
    %575 = vmatprep.subr.mxu0 0.0
    %576 = vmatpush1.msra.mxu0 0.0
    %577 = vmatprep.subr.mxu0 0.0
    %578 = vmatpush1.msra.mxu0 0.0
    %579 = vmatprep.subr.mxu0 0.0
    %580 = vmatpush1.msra.mxu0 0.0
    %581 = vmatprep.subr.mxu0 0.0
    %582 = vmatpush1.msra.mxu0 0.0
    %583 = vmatprep.subr.mxu0 0.0
    %584 = vmatpush1.msra.mxu0 0.0
    %585 = vmatprep.subr.mxu0 0.0
    %586 = vmatpush1.msra.mxu0 0.0
    %587 = vmatprep.subr.mxu0 0.0
    %588 = vmatpush1.msra.mxu0 0.0
    %589 = vmatprep.subr.mxu0 0.0
    %590 = vmatpush1.msra.mxu0 0.0
    %591 = vmatprep.mubr.f32.mxu0 0.0
    %592 = vmatmul.mubr.f32.gmra.mrb[0].mxu0 %v525
    %v593 = vpop.f32.mrb[0].mxu0
    %v594 = vadd.f32 0.0, %v593
    %v595 = vpop.f32.mrb[0].mxu0
    %596 = vdwg.mxu0
    %v597 = vadd.f32 %v524, %v594
    %v598 = vxor.u32 %v597, 2147483648
    %v599 = vmul.f32 %v598, 1.442695
    %v600 = vpow.pop %v599
    %v601 = vadd.f32 %v600, 1.0
    %v602 = vrcp.pop %v601
    %v603 = vmul.f32 1.0, %v602
    %v604 = vtanh.pop %v597
    %v605 = vmul.f32 %v603, %v512
    %607 = vrot.lane.b32.xlu0 %v604, 64
    %v608 = vpop.permute.xlu0 %607
    %v610 = vmul.f32 %v603, %v608
    %612 = vrot.lane.b32.xlu0 %v610, 32
    %v613 = vpop.permute.xlu0 %612
    %v615 = vadd.f32 %v605, %v613
    %v616 = vtanh.pop %v615
    %618 = vrot.lane.b32.xlu0 %v616, 64
    %v619 = vpop.permute.xlu0 %618
    %v621 = vmul.f32 %v603, %v619
    %623 = vrot.lane.b32.xlu0 %v621, 32
    %v624 = vpop.permute.xlu0 %623
    %626 = vst.msk [vmem:[#allocation3 + $0x18] sm:$0xff] %vm210, %v624
    %v627 = vld [vmem:[#allocation2 + $0x20] sm:$0xff]
    %v628 = vsel %vm210, %v624, 0
    %630 = vmatprep.subr.mxu0 0.0
    %631 = vmatpush1.msra.mxu0 %v203
    %632 = vmatprep.subr.mxu0 0.0
    %633 = vmatpush1.msra.mxu0 %v204
    %634 = vmatprep.subr.mxu0 0.0
    %635 = vmatpush1.msra.mxu0 %v205
    %636 = vmatprep.subr.mxu0 0.0
    %637 = vmatpush1.msra.mxu0 %v206
    %638 = vmatprep.subr.mxu0 0.0
    %639 = vmatpush1.msra.mxu0 0.0
    %640 = vmatprep.subr.mxu0 0.0
    %641 = vmatpush1.msra.mxu0 0.0
    %642 = vmatprep.subr.mxu0 0.0
    %643 = vmatpush1.msra.mxu0 0.0
    %644 = vmatprep.subr.mxu0 0.0
    %645 = vmatpush1.msra.mxu0 0.0
    %646 = vmatprep.subr.mxu0 0.0
    %647 = vmatpush1.msra.mxu0 0.0
    %648 = vmatprep.subr.mxu0 0.0
    %649 = vmatpush1.msra.mxu0 0.0
    %650 = vmatprep.subr.mxu0 0.0
    %651 = vmatpush1.msra.mxu0 0.0
    %652 = vmatprep.subr.mxu0 0.0
    %653 = vmatpush1.msra.mxu0 0.0
    %654 = vmatprep.subr.mxu0 0.0
    %655 = vmatpush1.msra.mxu0 0.0
    %656 = vmatprep.subr.mxu0 0.0
    %657 = vmatpush1.msra.mxu0 0.0
    %658 = vmatprep.subr.mxu0 0.0
    %659 = vmatpush1.msra.mxu0 0.0
    %660 = vmatprep.subr.mxu0 0.0
    %661 = vmatpush1.msra.mxu0 0.0
    %662 = vmatprep.subr.mxu0 0.0
    %663 = vmatpush1.msra.mxu0 0.0
    %664 = vmatprep.subr.mxu0 0.0
    %665 = vmatpush1.msra.mxu0 0.0
    %666 = vmatprep.subr.mxu0 0.0
    %667 = vmatpush1.msra.mxu0 0.0
    %668 = vmatprep.subr.mxu0 0.0
    %669 = vmatpush1.msra.mxu0 0.0
    %670 = vmatprep.subr.mxu0 0.0
    %671 = vmatpush1.msra.mxu0 0.0
    %672 = vmatprep.subr.mxu0 0.0
    %673 = vmatpush1.msra.mxu0 0.0
    %674 = vmatprep.subr.mxu0 0.0
    %675 = vmatpush1.msra.mxu0 0.0
    %676 = vmatprep.subr.mxu0 0.0
    %677 = vmatpush1.msra.mxu0 0.0
    %678 = vmatprep.subr.mxu0 0.0
    %679 = vmatpush1.msra.mxu0 0.0
    %680 = vmatprep.subr.mxu0 0.0
    %681 = vmatpush1.msra.mxu0 0.0
    %682 = vmatprep.subr.mxu0 0.0
    %683 = vmatpush1.msra.mxu0 0.0
    %684 = vmatprep.subr.mxu0 0.0
    %685 = vmatpush1.msra.mxu0 0.0
    %686 = vmatprep.subr.mxu0 0.0
    %687 = vmatpush1.msra.mxu0 0.0
    %688 = vmatprep.subr.mxu0 0.0
    %689 = vmatpush1.msra.mxu0 0.0
    %690 = vmatprep.subr.mxu0 0.0
    %691 = vmatpush1.msra.mxu0 0.0
    %692 = vmatprep.subr.mxu0 0.0
    %693 = vmatpush1.msra.mxu0 0.0
    %694 = vmatprep.mubr.f32.mxu0 0.0
    %695 = vmatmul.mubr.f32.gmra.mrb[0].mxu0 %v628
    %v696 = vpop.f32.mrb[0].mxu0
    %v697 = vadd.f32 0.0, %v696
    %v698 = vpop.f32.mrb[0].mxu0
    %699 = vdwg.mxu0
    %v700 = vadd.f32 %v627, %v697
    %v701 = vxor.u32 %v700, 2147483648
    %v702 = vmul.f32 %v701, 1.442695
    %v703 = vpow.pop %v702
    %v704 = vadd.f32 %v703, 1.0
    %v705 = vrcp.pop %v704
    %v706 = vmul.f32 1.0, %v705
    %v707 = vtanh.pop %v700
    %v708 = vmul.f32 %v706, %v615
    %710 = vrot.lane.b32.xlu0 %v707, 64
    %v711 = vpop.permute.xlu0 %710
    %v713 = vmul.f32 %v706, %v711
    %715 = vrot.lane.b32.xlu0 %v713, 32
    %v716 = vpop.permute.xlu0 %715
    %v718 = vadd.f32 %v708, %v716
    %v719 = vtanh.pop %v718
    %721 = vrot.lane.b32.xlu0 %v719, 64
    %v722 = vpop.permute.xlu0 %721
    %v724 = vmul.f32 %v706, %v722
    %726 = vrot.lane.b32.xlu0 %v724, 32
    %v727 = vpop.permute.xlu0 %726
    %729 = vst.msk [vmem:[#allocation3 + $0x20] sm:$0xff] %vm210, %v727
    %v730 = vld [vmem:[#allocation2 + $0x28] sm:$0xff]
    %v731 = vsel %vm210, %v727, 0
    %733 = vmatprep.subr.mxu0 0.0
    %734 = vmatpush1.msra.mxu0 %v203
    %735 = vmatprep.subr.mxu0 0.0
    %736 = vmatpush1.msra.mxu0 %v204
    %737 = vmatprep.subr.mxu0 0.0
    %738 = vmatpush1.msra.mxu0 %v205
    %739 = vmatprep.subr.mxu0 0.0
    %740 = vmatpush1.msra.mxu0 %v206
    %741 = vmatprep.subr.mxu0 0.0
    %742 = vmatpush1.msra.mxu0 0.0
    %743 = vmatprep.subr.mxu0 0.0
    %744 = vmatpush1.msra.mxu0 0.0
    %745 = vmatprep.subr.mxu0 0.0
    %746 = vmatpush1.msra.mxu0 0.0
    %747 = vmatprep.subr.mxu0 0.0
    %748 = vmatpush1.msra.mxu0 0.0
    %749 = vmatprep.subr.mxu0 0.0
    %750 = vmatpush1.msra.mxu0 0.0
    %751 = vmatprep.subr.mxu0 0.0
    %752 = vmatpush1.msra.mxu0 0.0
    %753 = vmatprep.subr.mxu0 0.0
    %754 = vmatpush1.msra.mxu0 0.0
    %755 = vmatprep.subr.mxu0 0.0
    %756 = vmatpush1.msra.mxu0 0.0
    %757 = vmatprep.subr.mxu0 0.0
    %758 = vmatpush1.msra.mxu0 0.0
    %759 = vmatprep.subr.mxu0 0.0
    %760 = vmatpush1.msra.mxu0 0.0
    %761 = vmatprep.subr.mxu0 0.0
    %762 = vmatpush1.msra.mxu0 0.0
    %763 = vmatprep.subr.mxu0 0.0
    %764 = vmatpush1.msra.mxu0 0.0
    %765 = vmatprep.subr.mxu0 0.0
    %766 = vmatpush1.msra.mxu0 0.0
    %767 = vmatprep.subr.mxu0 0.0
    %768 = vmatpush1.msra.mxu0 0.0
    %769 = vmatprep.subr.mxu0 0.0
    %770 = vmatpush1.msra.mxu0 0.0
    %771 = vmatprep.subr.mxu0 0.0
    %772 = vmatpush1.msra.mxu0 0.0
    %773 = vmatprep.subr.mxu0 0.0
    %774 = vmatpush1.msra.mxu0 0.0
    %775 = vmatprep.subr.mxu0 0.0
    %776 = vmatpush1.msra.mxu0 0.0
    %777 = vmatprep.subr.mxu0 0.0
    %778 = vmatpush1.msra.mxu0 0.0
    %779 = vmatprep.subr.mxu0 0.0
    %780 = vmatpush1.msra.mxu0 0.0
    %781 = vmatprep.subr.mxu0 0.0
    %782 = vmatpush1.msra.mxu0 0.0
    %783 = vmatprep.subr.mxu0 0.0
    %784 = vmatpush1.msra.mxu0 0.0
    %785 = vmatprep.subr.mxu0 0.0
    %786 = vmatpush1.msra.mxu0 0.0
    %787 = vmatprep.subr.mxu0 0.0
    %788 = vmatpush1.msra.mxu0 0.0
    %789 = vmatprep.subr.mxu0 0.0
    %790 = vmatpush1.msra.mxu0 0.0
    %791 = vmatprep.subr.mxu0 0.0
    %792 = vmatpush1.msra.mxu0 0.0
    %793 = vmatprep.subr.mxu0 0.0
    %794 = vmatpush1.msra.mxu0 0.0
    %795 = vmatprep.subr.mxu0 0.0
    %796 = vmatpush1.msra.mxu0 0.0
    %797 = vmatprep.mubr.f32.mxu0 0.0
    %798 = vmatmul.mubr.f32.gmra.mrb[0].mxu0 %v731
    %v799 = vpop.f32.mrb[0].mxu0
    %v800 = vadd.f32 0.0, %v799
    %v801 = vpop.f32.mrb[0].mxu0
    %802 = vdwg.mxu0
    %v803 = vadd.f32 %v730, %v800
    %v804 = vxor.u32 %v803, 2147483648
    %v805 = vmul.f32 %v804, 1.442695
    %v806 = vpow.pop %v805
    %v807 = vadd.f32 %v806, 1.0
    %v808 = vrcp.pop %v807
    %v809 = vmul.f32 1.0, %v808
    %v810 = vtanh.pop %v803
    %v811 = vmul.f32 %v809, %v718
    %813 = vrot.lane.b32.xlu0 %v810, 64
    %v814 = vpop.permute.xlu0 %813
    %v816 = vmul.f32 %v809, %v814
    %818 = vrot.lane.b32.xlu0 %v816, 32
    %v819 = vpop.permute.xlu0 %818
    %v821 = vadd.f32 %v811, %v819
    %v822 = vtanh.pop %v821
    %824 = vrot.lane.b32.xlu0 %v822, 64
    %v825 = vpop.permute.xlu0 %824
    %v827 = vmul.f32 %v809, %v825
    %829 = vrot.lane.b32.xlu0 %v827, 32
    %v830 = vpop.permute.xlu0 %829
    %832 = vst.msk [vmem:[#allocation3 + $0x28] sm:$0xff] %vm210, %v830
    %v833 = vld [vmem:[#allocation2 + $0x30] sm:$0xff]
    %v834 = vsel %vm210, %v830, 0
    %836 = vmatprep.subr.mxu0 0.0
    %837 = vmatpush1.msra.mxu0 %v203
    %838 = vmatprep.subr.mxu0 0.0
    %839 = vmatpush1.msra.mxu0 %v204
    %840 = vmatprep.subr.mxu0 0.0
    %841 = vmatpush1.msra.mxu0 %v205
    %842 = vmatprep.subr.mxu0 0.0
    %843 = vmatpush1.msra.mxu0 %v206
    %844 = vmatprep.subr.mxu0 0.0
    %845 = vmatpush1.msra.mxu0 0.0
    %846 = vmatprep.subr.mxu0 0.0
    %847 = vmatpush1.msra.mxu0 0.0
    %848 = vmatprep.subr.mxu0 0.0
    %849 = vmatpush1.msra.mxu0 0.0
    %850 = vmatprep.subr.mxu0 0.0
    %851 = vmatpush1.msra.mxu0 0.0
    %852 = vmatprep.subr.mxu0 0.0
    %853 = vmatpush1.msra.mxu0 0.0
    %854 = vmatprep.subr.mxu0 0.0
    %855 = vmatpush1.msra.mxu0 0.0
    %856 = vmatprep.subr.mxu0 0.0
    %857 = vmatpush1.msra.mxu0 0.0
    %858 = vmatprep.subr.mxu0 0.0
    %859 = vmatpush1.msra.mxu0 0.0
    %860 = vmatprep.subr.mxu0 0.0
    %861 = vmatpush1.msra.mxu0 0.0
    %862 = vmatprep.subr.mxu0 0.0
    %863 = vmatpush1.msra.mxu0 0.0
    %864 = vmatprep.subr.mxu0 0.0
    %865 = vmatpush1.msra.mxu0 0.0
    %866 = vmatprep.subr.mxu0 0.0
    %867 = vmatpush1.msra.mxu0 0.0
    %868 = vmatprep.subr.mxu0 0.0
    %869 = vmatpush1.msra.mxu0 0.0
    %870 = vmatprep.subr.mxu0 0.0
    %871 = vmatpush1.msra.mxu0 0.0
    %872 = vmatprep.subr.mxu0 0.0
    %873 = vmatpush1.msra.mxu0 0.0
    %874 = vmatprep.subr.mxu0 0.0
    %875 = vmatpush1.msra.mxu0 0.0
    %876 = vmatprep.subr.mxu0 0.0
    %877 = vmatpush1.msra.mxu0 0.0
    %878 = vmatprep.subr.mxu0 0.0
    %879 = vmatpush1.msra.mxu0 0.0
    %880 = vmatprep.subr.mxu0 0.0
    %881 = vmatpush1.msra.mxu0 0.0
    %882 = vmatprep.subr.mxu0 0.0
    %883 = vmatpush1.msra.mxu0 0.0
    %884 = vmatprep.subr.mxu0 0.0
    %885 = vmatpush1.msra.mxu0 0.0
    %886 = vmatprep.subr.mxu0 0.0
    %887 = vmatpush1.msra.mxu0 0.0
    %888 = vmatprep.subr.mxu0 0.0
    %889 = vmatpush1.msra.mxu0 0.0
    %890 = vmatprep.subr.mxu0 0.0
    %891 = vmatpush1.msra.mxu0 0.0
    %892 = vmatprep.subr.mxu0 0.0
    %893 = vmatpush1.msra.mxu0 0.0
    %894 = vmatprep.subr.mxu0 0.0
    %895 = vmatpush1.msra.mxu0 0.0
    %896 = vmatprep.subr.mxu0 0.0
    %897 = vmatpush1.msra.mxu0 0.0
    %898 = vmatprep.subr.mxu0 0.0
    %899 = vmatpush1.msra.mxu0 0.0
    %900 = vmatprep.mubr.f32.mxu0 0.0
    %901 = vmatmul.mubr.f32.gmra.mrb[0].mxu0 %v834
    %v902 = vpop.f32.mrb[0].mxu0
    %v903 = vadd.f32 0.0, %v902
    %v904 = vpop.f32.mrb[0].mxu0
    %905 = vdwg.mxu0
    %v906 = vadd.f32 %v833, %v903
    %v907 = vxor.u32 %v906, 2147483648
    %v908 = vmul.f32 %v907, 1.442695
    %v909 = vpow.pop %v908
    %v910 = vadd.f32 %v909, 1.0
    %v911 = vrcp.pop %v910
    %v912 = vmul.f32 1.0, %v911
    %v913 = vtanh.pop %v906
    %v914 = vmul.f32 %v912, %v821
    %916 = vrot.lane.b32.xlu0 %v913, 64
    %v917 = vpop.permute.xlu0 %916
    %v919 = vmul.f32 %v912, %v917
    %921 = vrot.lane.b32.xlu0 %v919, 32
    %v922 = vpop.permute.xlu0 %921
    %v924 = vadd.f32 %v914, %v922
    %v925 = vtanh.pop %v924
    %927 = vrot.lane.b32.xlu0 %v925, 64
    %v928 = vpop.permute.xlu0 %927
    %v930 = vmul.f32 %v912, %v928
    %932 = vrot.lane.b32.xlu0 %v930, 32
    %v933 = vpop.permute.xlu0 %932
    %935 = vst.msk [vmem:[#allocation3 + $0x30] sm:$0xff] %vm210, %v933
    %v936 = vld [vmem:[#allocation2 + $0x38] sm:$0xff]
    %v937 = vsel %vm210, %v933, 0
    %939 = vmatprep.subr.mxu0 0.0
    %940 = vmatpush1.msra.mxu0 %v203
    %941 = vmatprep.subr.mxu0 0.0
    %942 = vmatpush1.msra.mxu0 %v204
    %943 = vmatprep.subr.mxu0 0.0
    %944 = vmatpush1.msra.mxu0 %v205
    %945 = vmatprep.subr.mxu0 0.0
    %946 = vmatpush1.msra.mxu0 %v206
    %947 = vmatprep.subr.mxu0 0.0
    %948 = vmatpush1.msra.mxu0 0.0
    %949 = vmatprep.subr.mxu0 0.0
    %950 = vmatpush1.msra.mxu0 0.0
    %951 = vmatprep.subr.mxu0 0.0
    %952 = vmatpush1.msra.mxu0 0.0
    %953 = vmatprep.subr.mxu0 0.0
    %954 = vmatpush1.msra.mxu0 0.0
    %955 = vmatprep.subr.mxu0 0.0
    %956 = vmatpush1.msra.mxu0 0.0
    %957 = vmatprep.subr.mxu0 0.0
    %958 = vmatpush1.msra.mxu0 0.0
    %959 = vmatprep.subr.mxu0 0.0
    %960 = vmatpush1.msra.mxu0 0.0
    %961 = vmatprep.subr.mxu0 0.0
    %962 = vmatpush1.msra.mxu0 0.0
    %963 = vmatprep.subr.mxu0 0.0
    %964 = vmatpush1.msra.mxu0 0.0
    %965 = vmatprep.subr.mxu0 0.0
    %966 = vmatpush1.msra.mxu0 0.0
    %967 = vmatprep.subr.mxu0 0.0
    %968 = vmatpush1.msra.mxu0 0.0
    %969 = vmatprep.subr.mxu0 0.0
    %970 = vmatpush1.msra.mxu0 0.0
    %971 = vmatprep.subr.mxu0 0.0
    %972 = vmatpush1.msra.mxu0 0.0
    %973 = vmatprep.subr.mxu0 0.0
    %974 = vmatpush1.msra.mxu0 0.0
    %975 = vmatprep.subr.mxu0 0.0
    %976 = vmatpush1.msra.mxu0 0.0
    %977 = vmatprep.subr.mxu0 0.0
    %978 = vmatpush1.msra.mxu0 0.0
    %979 = vmatprep.subr.mxu0 0.0
    %980 = vmatpush1.msra.mxu0 0.0
    %981 = vmatprep.subr.mxu0 0.0
    %982 = vmatpush1.msra.mxu0 0.0
    %983 = vmatprep.subr.mxu0 0.0
    %984 = vmatpush1.msra.mxu0 0.0
    %985 = vmatprep.subr.mxu0 0.0
    %986 = vmatpush1.msra.mxu0 0.0
    %987 = vmatprep.subr.mxu0 0.0
    %988 = vmatpush1.msra.mxu0 0.0
    %989 = vmatprep.subr.mxu0 0.0
    %990 = vmatpush1.msra.mxu0 0.0
    %991 = vmatprep.subr.mxu0 0.0
    %992 = vmatpush1.msra.mxu0 0.0
    %993 = vmatprep.subr.mxu0 0.0
    %994 = vmatpush1.msra.mxu0 0.0
    %995 = vmatprep.subr.mxu0 0.0
    %996 = vmatpush1.msra.mxu0 0.0
    %997 = vmatprep.subr.mxu0 0.0
    %998 = vmatpush1.msra.mxu0 0.0
    %999 = vmatprep.subr.mxu0 0.0
    %1000 = vmatpush1.msra.mxu0 0.0
    %1001 = vmatprep.subr.mxu0 0.0
    %1002 = vmatpush1.msra.mxu0 0.0
    %1003 = vmatprep.mubr.f32.mxu0 0.0
    %1004 = vmatmul.mubr.f32.gmra.mrb[0].mxu0 %v937
    %v1005 = vpop.f32.mrb[0].mxu0
    %v1006 = vadd.f32 0.0, %v1005
    %v1007 = vpop.f32.mrb[0].mxu0
    %1008 = vdwg.mxu0
    %v1009 = vadd.f32 %v936, %v1006
    %v1010 = vxor.u32 %v1009, 2147483648
    %v1011 = vmul.f32 %v1010, 1.442695
    %v1012 = vpow.pop %v1011
    %v1013 = vadd.f32 %v1012, 1.0
    %v1014 = vrcp.pop %v1013
    %v1015 = vmul.f32 1.0, %v1014
    %v1016 = vtanh.pop %v1009
    %v1017 = vmul.f32 %v1015, %v924
    %1019 = vrot.lane.b32.xlu0 %v1016, 64
    %v1020 = vpop.permute.xlu0 %1019
    %v1022 = vmul.f32 %v1015, %v1020
    %1024 = vrot.lane.b32.xlu0 %v1022, 32
    %v1025 = vpop.permute.xlu0 %1024
    %v1027 = vadd.f32 %v1017, %v1025
    %v1028 = vtanh.pop %v1027
    %1030 = vrot.lane.b32.xlu0 %v1028, 64
    %v1031 = vpop.permute.xlu0 %1030
    %v1033 = vmul.f32 %v1015, %v1031
    %1035 = vrot.lane.b32.xlu0 %v1033, 32
    %v1036 = vpop.permute.xlu0 %1035
    %1038 = vst.msk [vmem:[#allocation3 + $0x38] sm:$0xff] %vm210, %v1036
    %1039 = vst.msk [vmem:[#allocation5] sm:$0xff] %vm210, %v1036
    %1041 = vrot.lane.b32.xlu0 %v1027, 96
    %v1042 = vpop.permute.xlu0 %1041
    %1044 = vst.msk [vmem:[#allocation7] sm:$0xff] %vm210, %v1042
    %v1045 = vld [vmem:[#allocation3] sm:$0xff]
    %v1046 = vld [vmem:[#allocation3 + $0x8] sm:$0xff]
    %v1047 = vld [vmem:[#allocation3 + $0x10] sm:$0xff]
    %v1048 = vld [vmem:[#allocation3 + $0x18] sm:$0xff]
    %v1049 = vld [vmem:[#allocation3 + $0x20] sm:$0xff]
    %v1050 = vld [vmem:[#allocation3 + $0x28] sm:$0xff]
    %v1051 = vld [vmem:[#allocation3 + $0x30] sm:$0xff]
    %v1052 = vld [vmem:[#allocation3 + $0x38] sm:$0xff]
    %v1053 = vld [vmem:[%s6] sm:$0xff]
    %v1054 = vld [vmem:[%s6 + $0x8] sm:$0xff]
    %v1055 = vld [vmem:[%s6 + $0x10] sm:$0xff]
    %v1056 = vld [vmem:[%s6 + $0x18] sm:$0xff]
    %v1057 = vld [vmem:[%s7] sm:$0x1]
    %v1059 = vlaneseq
    %v1060 = vshrl.u32 %v1059, 7
    %v1061 = vsub.s32 0, %v1060
    %v1062 = vrot.slane %v1057, %v1061
    %v1065 = vsel %vm210, %v1045, 0
    %v1068 = vsel %vm210, %v1046, 0
    %v1071 = vsel %vm210, %v1047, 0
    %v1074 = vsel %vm210, %v1048, 0
    %v1077 = vsel %vm210, %v1049, 0
    %v1080 = vsel %vm210, %v1050, 0
    %v1083 = vsel %vm210, %v1051, 0
    %v1086 = vsel %vm210, %v1052, 0
    %1088 = vmatprep.subr.mxu0 0.0
    %1089 = vmatpush1.msra.mxu0 %v1053
    %1090 = vmatprep.subr.mxu0 0.0
    %1091 = vmatpush1.msra.mxu0 %v1054
    %1092 = vmatprep.subr.mxu0 0.0
    %1093 = vmatpush1.msra.mxu0 %v1055
    %1094 = vmatprep.subr.mxu0 0.0
    %1095 = vmatpush1.msra.mxu0 %v1056
    %1096 = vmatprep.subr.mxu0 0.0
    %1097 = vmatpush1.msra.mxu0 0.0
    %1098 = vmatprep.subr.mxu0 0.0
    %1099 = vmatpush1.msra.mxu0 0.0
    %1100 = vmatprep.subr.mxu0 0.0
    %1101 = vmatpush1.msra.mxu0 0.0
    %1102 = vmatprep.subr.mxu0 0.0
    %1103 = vmatpush1.msra.mxu0 0.0
    %1104 = vmatprep.subr.mxu0 0.0
    %1105 = vmatpush1.msra.mxu0 0.0
    %1106 = vmatprep.subr.mxu0 0.0
    %1107 = vmatpush1.msra.mxu0 0.0
    %1108 = vmatprep.subr.mxu0 0.0
    %1109 = vmatpush1.msra.mxu0 0.0
    %1110 = vmatprep.subr.mxu0 0.0
    %1111 = vmatpush1.msra.mxu0 0.0
    %1112 = vmatprep.subr.mxu0 0.0
    %1113 = vmatpush1.msra.mxu0 0.0
    %1114 = vmatprep.subr.mxu0 0.0
    %1115 = vmatpush1.msra.mxu0 0.0
    %1116 = vmatprep.subr.mxu0 0.0
    %1117 = vmatpush1.msra.mxu0 0.0
    %1118 = vmatprep.subr.mxu0 0.0
    %1119 = vmatpush1.msra.mxu0 0.0
    %1120 = vmatprep.subr.mxu0 0.0
    %1121 = vmatpush1.msra.mxu0 0.0
    %1122 = vmatprep.subr.mxu0 0.0
    %1123 = vmatpush1.msra.mxu0 0.0
    %1124 = vmatprep.subr.mxu0 0.0
    %1125 = vmatpush1.msra.mxu0 0.0
    %1126 = vmatprep.subr.mxu0 0.0
    %1127 = vmatpush1.msra.mxu0 0.0
    %1128 = vmatprep.subr.mxu0 0.0
    %1129 = vmatpush1.msra.mxu0 0.0
    %1130 = vmatprep.subr.mxu0 0.0
    %1131 = vmatpush1.msra.mxu0 0.0
    %1132 = vmatprep.subr.mxu0 0.0
    %1133 = vmatpush1.msra.mxu0 0.0
    %1134 = vmatprep.subr.mxu0 0.0
    %1135 = vmatpush1.msra.mxu0 0.0
    %1136 = vmatprep.subr.mxu0 0.0
    %1137 = vmatpush1.msra.mxu0 0.0
    %1138 = vmatprep.subr.mxu0 0.0
    %1139 = vmatpush1.msra.mxu0 0.0
    %1140 = vmatprep.subr.mxu0 0.0
    %1141 = vmatpush1.msra.mxu0 0.0
    %1142 = vmatprep.subr.mxu0 0.0
    %1143 = vmatpush1.msra.mxu0 0.0
    %1144 = vmatprep.subr.mxu0 0.0
    %1145 = vmatpush1.msra.mxu0 0.0
    %1146 = vmatprep.subr.mxu0 0.0
    %1147 = vmatpush1.msra.mxu0 0.0
    %1148 = vmatprep.subr.mxu0 0.0
    %1149 = vmatpush1.msra.mxu0 0.0
    %1150 = vmatprep.subr.mxu0 0.0
    %1151 = vmatpush1.msra.mxu0 0.0
    %1152 = vmatprep.mubr.f32.mxu0 0.0
    %1153 = vmatmul.mubr.f32.gmra.mrb[0].mxu0 %v1065
    %v1154 = vpop.f32.mrb[0].mxu0
    %v1155 = vadd.f32 %v1062, %v1154
    %v1156 = vpop.f32.mrb[0].mxu0
    %1157 = vmatprep.mubr.f32.mxu0 0.0
    %1158 = vmatmul.mubr.f32.gmra.mrb[0].mxu0 %v1068
    %v1159 = vpop.f32.mrb[0].mxu0
    %v1160 = vadd.f32 %v1062, %v1159
    %v1161 = vpop.f32.mrb[0].mxu0
    %1162 = vmatprep.mubr.f32.mxu0 0.0
    %1163 = vmatmul.mubr.f32.gmra.mrb[0].mxu0 %v1071
    %v1164 = vpop.f32.mrb[0].mxu0
    %v1165 = vadd.f32 %v1062, %v1164
    %v1166 = vpop.f32.mrb[0].mxu0
    %1167 = vmatprep.mubr.f32.mxu0 0.0
    %1168 = vmatmul.mubr.f32.gmra.mrb[0].mxu0 %v1074
    %v1169 = vpop.f32.mrb[0].mxu0
    %v1170 = vadd.f32 %v1062, %v1169
    %v1171 = vpop.f32.mrb[0].mxu0
    %1172 = vmatprep.mubr.f32.mxu0 0.0
    %1173 = vmatmul.mubr.f32.gmra.mrb[0].mxu0 %v1077
    %v1174 = vpop.f32.mrb[0].mxu0
    %v1175 = vadd.f32 %v1062, %v1174
    %v1176 = vpop.f32.mrb[0].mxu0
    %1177 = vmatprep.mubr.f32.mxu0 0.0
    %1178 = vmatmul.mubr.f32.gmra.mrb[0].mxu0 %v1080
    %v1179 = vpop.f32.mrb[0].mxu0
    %v1180 = vadd.f32 %v1062, %v1179
    %v1181 = vpop.f32.mrb[0].mxu0
    %1182 = vmatprep.mubr.f32.mxu0 0.0
    %1183 = vmatmul.mubr.f32.gmra.mrb[0].mxu0 %v1083
    %v1184 = vpop.f32.mrb[0].mxu0
    %v1185 = vadd.f32 %v1062, %v1184
    %v1186 = vpop.f32.mrb[0].mxu0
    %1187 = vmatprep.mubr.f32.mxu0 0.0
    %1188 = vmatmul.mubr.f32.gmra.mrb[0].mxu0 %v1086
    %v1189 = vpop.f32.mrb[0].mxu0
    %v1190 = vadd.f32 %v1062, %v1189
    %v1191 = vpop.f32.mrb[0].mxu0
    %1192 = vdwg.mxu0
    %v1193 = vmax.f32 %v1155, 0.0
    %v1194 = vmax.f32 %v1160, 0.0
    %v1195 = vmax.f32 %v1165, 0.0
    %v1196 = vmax.f32 %v1170, 0.0
    %v1197 = vmax.f32 %v1175, 0.0
    %v1198 = vmax.f32 %v1180, 0.0
    %v1199 = vmax.f32 %v1185, 0.0
    %v1200 = vmax.f32 %v1190, 0.0
    %v1201 = vld [vmem:[%s8] sm:$0xff]
    %v1202 = vld [vmem:[%s8 + $0x8] sm:$0xff]
    %v1203 = vld [vmem:[%s8 + $0x10] sm:$0xff]
    %v1204 = vld [vmem:[%s8 + $0x18] sm:$0xff]
    %v1205 = vld [vmem:[%s8 + $0x20] sm:$0xff]
    %v1206 = vld [vmem:[%s8 + $0x28] sm:$0xff]
    %v1207 = vld [vmem:[%s8 + $0x30] sm:$0xff]
    %v1208 = vld [vmem:[%s8 + $0x38] sm:$0xff]
    %v1209 = vld [vmem:[%s9] sm:$0x1]
    %v1211 = vlaneseq
    %v1212 = vshrl.u32 %v1211, 7
    %v1213 = vsub.s32 0, %v1212
    %v1214 = vrot.slane %v1209, %v1213
    %vm1216 = vcmask 523264
    %v1218 = vsel %vm1216, %v1193, 0
    %v1221 = vsel %vm1216, %v1194, 0
    %v1224 = vsel %vm1216, %v1195, 0
    %v1227 = vsel %vm1216, %v1196, 0
    %v1230 = vsel %vm1216, %v1197, 0
    %v1233 = vsel %vm1216, %v1198, 0
    %v1236 = vsel %vm1216, %v1199, 0
    %v1239 = vsel %vm1216, %v1200, 0
    %1241 = vmatprep.subr.mxu0 0.0
    %1242 = vmatpush1.msra.mxu0 %v1201
    %1243 = vmatprep.subr.mxu0 0.0
    %1244 = vmatpush1.msra.mxu0 %v1202
    %1245 = vmatprep.subr.mxu0 0.0
    %1246 = vmatpush1.msra.mxu0 %v1203
    %1247 = vmatprep.subr.mxu0 0.0
    %1248 = vmatpush1.msra.mxu0 %v1204
    %1249 = vmatprep.subr.mxu0 0.0
    %1250 = vmatpush1.msra.mxu0 %v1205
    %1251 = vmatprep.subr.mxu0 0.0
    %1252 = vmatpush1.msra.mxu0 %v1206
    %1253 = vmatprep.subr.mxu0 0.0
    %1254 = vmatpush1.msra.mxu0 %v1207
    %1255 = vmatprep.subr.mxu0 0.0
    %1256 = vmatpush1.msra.mxu0 %v1208
    %1257 = vmatprep.subr.mxu0 0.0
    %1258 = vmatpush1.msra.mxu0 0.0
    %1259 = vmatprep.subr.mxu0 0.0
    %1260 = vmatpush1.msra.mxu0 0.0
    %1261 = vmatprep.subr.mxu0 0.0
    %1262 = vmatpush1.msra.mxu0 0.0
    %1263 = vmatprep.subr.mxu0 0.0
    %1264 = vmatpush1.msra.mxu0 0.0
    %1265 = vmatprep.subr.mxu0 0.0
    %1266 = vmatpush1.msra.mxu0 0.0
    %1267 = vmatprep.subr.mxu0 0.0
    %1268 = vmatpush1.msra.mxu0 0.0
    %1269 = vmatprep.subr.mxu0 0.0
    %1270 = vmatpush1.msra.mxu0 0.0
    %1271 = vmatprep.subr.mxu0 0.0
    %1272 = vmatpush1.msra.mxu0 0.0
    %1273 = vmatprep.subr.mxu0 0.0
    %1274 = vmatpush1.msra.mxu0 0.0
    %1275 = vmatprep.subr.mxu0 0.0
    %1276 = vmatpush1.msra.mxu0 0.0
    %1277 = vmatprep.subr.mxu0 0.0
    %1278 = vmatpush1.msra.mxu0 0.0
    %1279 = vmatprep.subr.mxu0 0.0
    %1280 = vmatpush1.msra.mxu0 0.0
    %1281 = vmatprep.subr.mxu0 0.0
    %1282 = vmatpush1.msra.mxu0 0.0
    %1283 = vmatprep.subr.mxu0 0.0
    %1284 = vmatpush1.msra.mxu0 0.0
    %1285 = vmatprep.subr.mxu0 0.0
    %1286 = vmatpush1.msra.mxu0 0.0
    %1287 = vmatprep.subr.mxu0 0.0
    %1288 = vmatpush1.msra.mxu0 0.0
    %1289 = vmatprep.subr.mxu0 0.0
    %1290 = vmatpush1.msra.mxu0 0.0
    %1291 = vmatprep.subr.mxu0 0.0
    %1292 = vmatpush1.msra.mxu0 0.0
    %1293 = vmatprep.subr.mxu0 0.0
    %1294 = vmatpush1.msra.mxu0 0.0
    %1295 = vmatprep.subr.mxu0 0.0
    %1296 = vmatpush1.msra.mxu0 0.0
    %1297 = vmatprep.subr.mxu0 0.0
    %1298 = vmatpush1.msra.mxu0 0.0
    %1299 = vmatprep.subr.mxu0 0.0
    %1300 = vmatpush1.msra.mxu0 0.0
    %1301 = vmatprep.subr.mxu0 0.0
    %1302 = vmatpush1.msra.mxu0 0.0
    %1303 = vmatprep.subr.mxu0 0.0
    %1304 = vmatpush1.msra.mxu0 0.0
    %1305 = vmatprep.mubr.f32.mxu0 0.0
    %1306 = vmatmul.mubr.f32.gmra.mrb[0].mxu0 %v1218
    %v1307 = vpop.f32.mrb[0].mxu0
    %v1308 = vadd.f32 %v1214, %v1307
    %v1309 = vpop.f32.mrb[0].mxu0
    %1310 = vmatprep.mubr.f32.mxu0 0.0
    %1311 = vmatmul.mubr.f32.gmra.mrb[0].mxu0 %v1221
    %v1312 = vpop.f32.mrb[0].mxu0
    %v1313 = vadd.f32 %v1214, %v1312
    %v1314 = vpop.f32.mrb[0].mxu0
    %1315 = vmatprep.mubr.f32.mxu0 0.0
    %1316 = vmatmul.mubr.f32.gmra.mrb[0].mxu0 %v1224
    %v1317 = vpop.f32.mrb[0].mxu0
    %v1318 = vadd.f32 %v1214, %v1317
    %v1319 = vpop.f32.mrb[0].mxu0
    %1320 = vmatprep.mubr.f32.mxu0 0.0
    %1321 = vmatmul.mubr.f32.gmra.mrb[0].mxu0 %v1227
    %v1322 = vpop.f32.mrb[0].mxu0
    %v1323 = vadd.f32 %v1214, %v1322
    %v1324 = vpop.f32.mrb[0].mxu0
    %1325 = vmatprep.mubr.f32.mxu0 0.0
    %1326 = vmatmul.mubr.f32.gmra.mrb[0].mxu0 %v1230
    %v1327 = vpop.f32.mrb[0].mxu0
    %v1328 = vadd.f32 %v1214, %v1327
    %v1329 = vpop.f32.mrb[0].mxu0
    %1330 = vmatprep.mubr.f32.mxu0 0.0
    %1331 = vmatmul.mubr.f32.gmra.mrb[0].mxu0 %v1233
    %v1332 = vpop.f32.mrb[0].mxu0
    %v1333 = vadd.f32 %v1214, %v1332
    %v1334 = vpop.f32.mrb[0].mxu0
    %1335 = vmatprep.mubr.f32.mxu0 0.0
    %1336 = vmatmul.mubr.f32.gmra.mrb[0].mxu0 %v1236
    %v1337 = vpop.f32.mrb[0].mxu0
    %v1338 = vadd.f32 %v1214, %v1337
    %v1339 = vpop.f32.mrb[0].mxu0
    %1340 = vmatprep.mubr.f32.mxu0 0.0
    %1341 = vmatmul.mubr.f32.gmra.mrb[0].mxu0 %v1239
    %v1342 = vpop.f32.mrb[0].mxu0
    %v1343 = vadd.f32 %v1214, %v1342
    %v1344 = vpop.f32.mrb[0].mxu0
    %1345 = vdwg.mxu0
    %v1346 = vmax.f32 %v1308, 0.0
    %v1347 = vmax.f32 %v1313, 0.0
    %v1348 = vmax.f32 %v1318, 0.0
    %v1349 = vmax.f32 %v1323, 0.0
    %v1350 = vmax.f32 %v1328, 0.0
    %v1351 = vmax.f32 %v1333, 0.0
    %v1352 = vmax.f32 %v1338, 0.0
    %v1353 = vmax.f32 %v1343, 0.0
    %v1354 = vld [vmem:[%s10] sm:$0x1]
    %v1356 = vlaneseq
    %v1357 = vshrl.u32 %v1356, 7
    %v1358 = vsub.s32 0, %v1357
    %v1359 = vrot.slane %v1354, %v1358
    %v1361 = vmul.f32 %v1346, %v1359
    %v1362 = vmul.f32 %v1347, %v1359
    %v1363 = vmul.f32 %v1348, %v1359
    %v1364 = vmul.f32 %v1349, %v1359
    %v1365 = vmul.f32 %v1350, %v1359
    %v1366 = vmul.f32 %v1351, %v1359
    %v1367 = vmul.f32 %v1352, %v1359
    %v1368 = vmul.f32 %v1353, %v1359
    %v1369 = vsel %vm210, %v1361, 0.0
    %1370 = vadd.xlane.f32.xlu0 %v1369
    %v1371 = vpop.xlane.xlu0 %1370
    %v1372 = vsel %vm210, %v1362, 0.0
    %1373 = vadd.xlane.f32.xlu0 %v1372
    %v1374 = vpop.xlane.xlu0 %1373
    %v1375 = vsel %vm210, %v1363, 0.0
    %1376 = vadd.xlane.f32.xlu0 %v1375
    %v1377 = vpop.xlane.xlu0 %1376
    %v1378 = vsel %vm210, %v1364, 0.0
    %1379 = vadd.xlane.f32.xlu0 %v1378
    %v1380 = vpop.xlane.xlu0 %1379
    %v1381 = vsel %vm210, %v1365, 0.0
    %1382 = vadd.xlane.f32.xlu0 %v1381
    %v1383 = vpop.xlane.xlu0 %1382
    %v1384 = vsel %vm210, %v1366, 0.0
    %1385 = vadd.xlane.f32.xlu0 %v1384
    %v1386 = vpop.xlane.xlu0 %1385
    %v1387 = vsel %vm210, %v1367, 0.0
    %1388 = vadd.xlane.f32.xlu0 %v1387
    %v1389 = vpop.xlane.xlu0 %1388
    %v1390 = vsel %vm210, %v1368, 0.0
    %1391 = vadd.xlane.f32.xlu0 %v1390
    %v1392 = vpop.xlane.xlu0 %1391
    %v1393 = vld [vmem:[#allocation4] sm:$0x1]
    %v1395 = vlaneseq
    %v1396 = vshrl.u32 %v1395, 7
    %v1397 = vsub.s32 0, %v1396
    %v1398 = vrot.slane %v1393, %v1397
    %v1400 = vadd.f32 %v1371, %v1398
    %v1401 = vadd.f32 %v1374, %v1398
    %v1402 = vadd.f32 %v1377, %v1398
    %v1403 = vadd.f32 %v1380, %v1398
    %v1404 = vadd.f32 %v1383, %v1398
    %v1405 = vadd.f32 %v1386, %v1398
    %v1406 = vadd.f32 %v1389, %v1398
    %v1407 = vadd.f32 %v1392, %v1398
    %vm1408 = vcmask 7168
    %1409 = vst.msk [vmem:[%s12] sm:$0xff] %vm1408, %v1400
    %1410 = vst.msk [vmem:[%s12 + $0x8] sm:$0xff] %vm1408, %v1401
    %1411 = vst.msk [vmem:[%s12 + $0x10] sm:$0xff] %vm1408, %v1402
    %1412 = vst.msk [vmem:[%s12 + $0x18] sm:$0xff] %vm1408, %v1403
    %1413 = vst.msk [vmem:[%s12 + $0x20] sm:$0xff] %vm1408, %v1404
    %1414 = vst.msk [vmem:[%s12 + $0x28] sm:$0xff] %vm1408, %v1405
    %1415 = vst.msk [vmem:[%s12 + $0x30] sm:$0xff] %vm1408, %v1406
    %1416 = vst.msk [vmem:[%s12 + $0x38] sm:$0xff] %vm1408, %v1407
    // Predicated region
    $region50: #{tpu_custom_call.1} parent=1 // pred_check
      _
    $region51: #{tpu_custom_call.1} parent=1 // pred_check_branch
      %1418 = sbr.rel (0) target = $region53
    $region52: #{tpu_custom_call.1} parent=1 // pred_region
      _
    $region53: #{tpu_custom_call.1} parent=1 // pred_fallthru
      _
    // Predicated region
    $region54: #{tpu_custom_call.1} parent=1 // pred_check
      _
    $region55: #{tpu_custom_call.1} parent=1 // pred_check_branch
      %1420 = sbr.rel (0) target = $region57
    $region56: #{tpu_custom_call.1} parent=1 // pred_region
      %s1422 = ssub.s32 128, 128
      %1423 = vsyncadd [#allocation6], %s1422
      %s1425 = sshll.u32 [#allocation5], 4
      %s1426 = int_to_ptr.vmem [resolvable:$true] %s1425
      %1428 = dma.vmem_to_hbm [thread:$0]  %s1426, 128, %s13, [#allocation6]
    $region57: #{tpu_custom_call.1} parent=1 // pred_fallthru
      _
    // Predicated region
    $region58: #{tpu_custom_call.1} parent=1 // pred_check
      _
    $region59: #{tpu_custom_call.1} parent=1 // pred_check_branch
      %1430 = sbr.rel (0) target = $region61
    $region60: #{tpu_custom_call.1} parent=1 // pred_region
      %s1432 = ssub.s32 128, 128
      %1433 = vsyncadd [#allocation8], %s1432
      %s1435 = sshll.u32 [#allocation7], 4
      %s1436 = int_to_ptr.vmem [resolvable:$true] %s1435
      %1438 = dma.vmem_to_hbm [thread:$0]  %s1436, 128, %s14, [#allocation8]
    $region61: #{tpu_custom_call.1} parent=1 // pred_fallthru
      _
    // Predicated region
    $region62: #{tpu_custom_call.1} parent=1 // pred_check
      _
    $region63: #{tpu_custom_call.1} parent=1 // pred_check_branch
      %1440 = sbr.rel (0) target = $region65
    $region64: #{tpu_custom_call.1} parent=1 // pred_region
      _
    $region65: #{tpu_custom_call.1} parent=1 // pred_fallthru
      _
    // Predicated region
    $region66: #{tpu_custom_call.1} parent=1 // pred_check
      _
    $region67: #{tpu_custom_call.1} parent=1 // pred_check_branch
      %1442 = sbr.rel (0) target = $region69
    $region68: #{tpu_custom_call.1} parent=1 // pred_region
      %1443 = dma.done [#allocation6], 128
    $region69: #{tpu_custom_call.1} parent=1 // pred_fallthru
      _
    // Predicated region
    $region70: #{tpu_custom_call.1} parent=1 // pred_check
      _
    $region71: #{tpu_custom_call.1} parent=1 // pred_check_branch
      %1445 = sbr.rel (0) target = $region73
    $region72: #{tpu_custom_call.1} parent=1 // pred_region
      %1446 = dma.done [#allocation8], 128
    $region73: #{tpu_custom_call.1} parent=1 // pred_fallthru
      _
    %1447 = vsyncpa [#allocation6], 1
    %1448 = vsyncpa [#allocation8], 1

</llo_original>
